<compile_context>
chip_gen: v7x
topology: tpu7x:2x2x1
jax: 0.10.0
libtpu: 0.0.40
codegen_flags: <defaults>
</compile_context>

<pallas_src>
import jax
import jax.numpy as jnp
from jax import lax
from jax.experimental import pallas as pl
from jax.experimental.pallas import tpu as pltpu


# ----------------------------------------------------------------------------
# Fused kernel: per stream s computes the full (B, L, H) stream output.
# ----------------------------------------------------------------------------
def _fused_kernel(kv1_idx_ref, q2_idx_ref, kv2_idx_ref,     # scalar prefetch (SMEM)
                  xs_ref,                                    # (3, B, L, H) stacked acts
                  ffw_ref, ffb_ref, ffg_ref, ffbeta_ref,     # FeedForward (H -> H)
                  hw1w_ref, hw1b_ref,                        # Highway layer 1 (4H -> 8H fused)
                  hw2w_ref, hw2b_ref,                        # Highway layer 2 (4H -> 8H fused)
                  ff2w_ref, ff2b_ref, ff2g_ref, ff2beta_ref, # FeedForward2 (4H -> H)
                  o_ref):
    s = pl.program_id(0)
    _, B, L, H = xs_ref.shape
    BL = B * L
    H4 = 4 * H

    # All three streams stay VMEM-resident (constant block index across the
    # grid); pick this stream's attention operands via dynamic first-axis
    # indexing driven by the SMEM prefetch tables — no duplicate DMA.
    x = xs_ref[s]                          # (B, L, H): Q col1 / self KV / highway input
    kv1 = xs_ref[kv1_idx_ref[s]]           # K/V for column 1
    q2 = xs_ref[q2_idx_ref[s]]             # Q   for column 2
    kv2 = xs_ref[kv2_idx_ref[s]]           # K/V for column 2

    scale = H ** (-0.5)
    x_q = (x * scale).astype(jnp.bfloat16)      # hoisted query scaling (col1 + self)
    q2_q = (q2 * scale).astype(jnp.bfloat16)

    def attn(qb, kv):
        kb = kv.astype(jnp.bfloat16)
        sc = jnp.einsum("bqd,bkd->bqk", qb, kb,
                        preferred_element_type=jnp.float32)
        sc = sc - jnp.max(sc, axis=-1, keepdims=True)
        p = jnp.exp(sc)
        l = jnp.sum(p, axis=-1, keepdims=True)
        ctx = jnp.einsum("bqk,bkd->bqd", p.astype(jnp.bfloat16), kb,
                         preferred_element_type=jnp.float32)
        return ctx * pl.reciprocal(l, approx=True)   # normalize after PV matmul

    ctx1 = attn(x_q, kv1).reshape(BL, H)     # cross attention, column 1
    ctx2 = attn(q2_q, kv2).reshape(BL, H)    # cross attention, column 2
    ctx_s = attn(x_q, x).reshape(BL, H)      # self attention,  column 3

    def layernorm(y, g, b):
        mu = jnp.mean(y, axis=-1, keepdims=True)
        var = jnp.maximum(jnp.mean(y * y, axis=-1, keepdims=True) - mu * mu, 0.0)
        return (y - mu) * lax.rsqrt(var + 1e-5) * g + b

    # FeedForward (Linear H->H, ReLU, LayerNorm) on both cross contexts at once
    # (stacked along M so the matmul uses 2*B*L rows).
    c = jnp.concatenate([ctx1, ctx2], axis=0).astype(jnp.bfloat16)    # (2BL, H)
    y = jnp.dot(c, ffw_ref[...], preferred_element_type=jnp.float32) + ffb_ref[...]
    y = layernorm(jnp.maximum(y, 0.0), ffg_ref[...], ffbeta_ref[...])
    col1 = y[:BL]
    col2 = y[BL:]

    # Highway input, lane-dense (BL, 4H).
    h = jnp.concatenate([x.reshape(BL, H), col1, col2, ctx_s], axis=-1)

    # Two Highway layers; gate+linear fused into a single (4H, 8H) matmul each.
    for w_ref, b_ref in ((hw1w_ref, hw1b_ref), (hw2w_ref, hw2b_ref)):
        gl = jnp.dot(h.astype(jnp.bfloat16), w_ref[...],
                     preferred_element_type=jnp.float32) + b_ref[...]
        g = jax.nn.sigmoid(gl[:, :H4])
        nl = jnp.maximum(gl[:, H4:], 0.0)
        h = g * (nl - h) + h                 # == g*nl + (1-g)*h

    # FeedForward2 (Linear 4H->H, ReLU, LayerNorm)
    z = jnp.dot(h.astype(jnp.bfloat16), ff2w_ref[...],
                preferred_element_type=jnp.float32) + ff2b_ref[...]
    z = layernorm(jnp.maximum(z, 0.0), ff2g_ref[...], ff2beta_ref[...])
    o_ref[...] = z.reshape(B, L, H).astype(o_ref.dtype)


# ----------------------------------------------------------------------------
# Index maps (grid = (stream,); scalar-prefetch refs passed positionally)
# ----------------------------------------------------------------------------
def _const4_map(s, *_):  return (0, 0, 0, 0)
def _w_map(s, *_):       return (0, 0)
def _out_map(s, *_):     return (s, 0, 0, 0)


# ----------------------------------------------------------------------------
# Parameter preparation (done once, outside the per-call path)
# ----------------------------------------------------------------------------
def prepare_kernel_params(params):
    wl1, bl1, wg1, bg1, wl2, bl2, wg2, bg2 = params["highway"]
    bf16 = jnp.bfloat16
    return {
        "ff_w": params["ff_w"].astype(bf16),
        "ff_b": params["ff_b"], "ff_g": params["ff_g"], "ff_beta": params["ff_beta"],
        # Fused Highway weights: columns [gate | linear] -> one (4H, 8H) matmul.
        "hw1_w": jnp.concatenate([wg1, wl1], axis=1).astype(bf16),
        "hw1_b": jnp.concatenate([bg1, bl1], axis=1),
        "hw2_w": jnp.concatenate([wg2, wl2], axis=1).astype(bf16),
        "hw2_b": jnp.concatenate([bg2, bl2], axis=1),
        "ff2_w": params["ff2_w"].astype(bf16),
        "ff2_b": params["ff2_b"], "ff2_g": params["ff2_g"], "ff2_beta": params["ff2_beta"],
    }


# ----------------------------------------------------------------------------
# Wrapper
# ----------------------------------------------------------------------------
@jax.jit
def triple_attention_highway(kp, history, utterance, response):
    B, L, H = history.shape
    H4 = 4 * H
    BL = B * L

    # Stacked activations: stream 0 = history, 1 = utterance, 2 = response.
    x = jnp.stack([history, utterance, response], axis=0)          # (3, B, L, H)

    # Per-stream operand tables:
    #   column 1:  Q = stream itself,  K/V = kv1_idx[s]
    #   column 2:  Q = q2_idx[s],      K/V = kv2_idx[s]
    kv1_idx = jnp.array([1, 0, 0], jnp.int32)
    q2_idx = jnp.array([0, 2, 1], jnp.int32)
    kv2_idx = jnp.array([2, 1, 2], jnp.int32)

    weight_args = (kp["ff_w"], kp["ff_b"], kp["ff_g"], kp["ff_beta"],
                   kp["hw1_w"], kp["hw1_b"], kp["hw2_w"], kp["hw2_b"],
                   kp["ff2_w"], kp["ff2_b"], kp["ff2_g"], kp["ff2_beta"])

    # Advisory cost estimate for XLA scheduling around the fused custom call.
    flops = 3 * (12 * B * L * L * H                 # 3 attentions (QK^T + PV)
                 + 2 * (2 * BL) * H * H             # FeedForward (both contexts)
                 + 2 * (2 * BL * H4 * (2 * H4))     # Highway, 2 fused layers
                 + 2 * BL * H4 * H)                 # FeedForward2
    transcendentals = 3 * (3 * BL * L + 2 * BL * H4 + 4 * BL)
    bytes_accessed = (x.size * x.dtype.itemsize
                      + sum(a.size * a.dtype.itemsize for a in weight_args)
                      + 3 * BL * H * history.dtype.itemsize)

    out = pl.pallas_call(
        _fused_kernel,
        out_shape=jax.ShapeDtypeStruct((3, B, L, H), history.dtype),
        grid_spec=pltpu.PrefetchScalarGridSpec(
            num_scalar_prefetch=3,
            grid=(3,),
            in_specs=[
                pl.BlockSpec((3, B, L, H), _const4_map),        # stacked activations
                pl.BlockSpec((H, H), _w_map),                   # ff_w (bf16)
                pl.BlockSpec((1, H), _w_map),                   # ff_b
                pl.BlockSpec((1, H), _w_map),                   # ff_g
                pl.BlockSpec((1, H), _w_map),                   # ff_beta
                pl.BlockSpec((H4, 2 * H4), _w_map),             # hw1_w (bf16, fused)
                pl.BlockSpec((1, 2 * H4), _w_map),              # hw1_b
                pl.BlockSpec((H4, 2 * H4), _w_map),             # hw2_w (bf16, fused)
                pl.BlockSpec((1, 2 * H4), _w_map),              # hw2_b
                pl.BlockSpec((H4, H), _w_map),                  # ff2_w (bf16)
                pl.BlockSpec((1, H), _w_map),                   # ff2_b
                pl.BlockSpec((1, H), _w_map),                   # ff2_g
                pl.BlockSpec((1, H), _w_map),                   # ff2_beta
            ],
            out_specs=pl.BlockSpec((None, B, L, H), _out_map),
        ),
        compiler_params=pltpu.CompilerParams(
            dimension_semantics=("parallel",),
            vmem_limit_bytes=32 * 1024 * 1024),
        cost_estimate=pl.CostEstimate(flops=flops,
                                      transcendentals=transcendentals,
                                      bytes_accessed=bytes_accessed),
    )(kv1_idx, q2_idx, kv2_idx, x, *weight_args)

    # Same return ordering as the PyTorch module:
    # (FF2(highway_history), FF2(highway_utterance), FF2(highway_response)).
    return out[0], out[1], out[2]


# ----------------------------------------------------------------------------
# Parameter initialization (deterministic, synthetic)
# ----------------------------------------------------------------------------
def init_params(key, hidden_size):
    H = hidden_size
    H4 = 4 * H
    keys = jax.random.split(key, 6)

    def lin(k, din, dout, scale=0.1):
        kw, kb = jax.random.split(k)
        w = scale * jax.random.normal(kw, (din, dout), jnp.float32)   # (in, out)
        b = scale * jax.random.normal(kb, (1, dout), jnp.float32)
        return w, b

    params = {}
    params["ff_w"], params["ff_b"] = lin(keys[0], H, H)
    params["ff_g"] = jnp.ones((1, H), jnp.float32)
    params["ff_beta"] = jnp.zeros((1, H), jnp.float32)
    params["ff2_w"], params["ff2_b"] = lin(keys[1], H4, H)
    params["ff2_g"] = jnp.ones((1, H), jnp.float32)
    params["ff2_beta"] = jnp.zeros((1, H), jnp.float32)
    wl1, bl1 = lin(keys[2], H4, H4)
    wg1, bg1 = lin(keys[3], H4, H4)
    wl2, bl2 = lin(keys[4], H4, H4)
    wg2, bg2 = lin(keys[5], H4, H4)
    params["highway"] = (wl1, bl1, wg1, bg1, wl2, bl2, wg2, bg2)
    return params


# ----------------------------------------------------------------------------
# Pure-JAX reference (mirrors TripleAttentionHighWay.forward, eval mode).
# Matmul operands are cast to bf16 exactly like the kernel (f32 accumulation),
# so the comparison validates wiring/structure at matched precision.
# ----------------------------------------------------------------------------
def reference(params, history, utterance, response):
    bf16, f32 = jnp.bfloat16, jnp.float32

    def attn(q, k, v):
        scale = q.shape[-1] ** (-0.5)
        qb = (q * scale).astype(bf16)
        kb = k.astype(bf16)
        s = jnp.einsum("bqd,bkd->bqk", qb, kb, preferred_element_type=f32)
        s = s - jnp.max(s, axis=-1, keepdims=True)
        p = jnp.exp(s)
        ctx = jnp.einsum("bqk,bkd->bqd", p.astype(bf16), v.astype(bf16),
                         preferred_element_type=f32)
        return ctx / jnp.sum(p, axis=-1, keepdims=True)

    def ffn(t, w, b, g, beta):
        y = jnp.maximum(jnp.dot(t.astype(bf16), w.astype(bf16),
                                preferred_element_type=f32) + b, 0.0)
        mu = jnp.mean(y, -1, keepdims=True)
        var = jnp.mean((y - mu) ** 2, -1, keepdims=True)
        return (y - mu) / jnp.sqrt(var + 1e-5) * g + beta

    def highway(t, hw):
        wl1, bl1, wg1, bg1, wl2, bl2, wg2, bg2 = hw
        for wl, bl, wg, bg in ((wl1, bl1, wg1, bg1), (wl2, bl2, wg2, bg2)):
            tb = t.astype(bf16)
            g = jax.nn.sigmoid(jnp.dot(tb, wg.astype(bf16),
                                       preferred_element_type=f32) + bg)
            nl = jnp.maximum(jnp.dot(tb, wl.astype(bf16),
                                     preferred_element_type=f32) + bl, 0.0)
            t = g * nl + (1.0 - g) * t
        return t

    ff1 = lambda t: ffn(t, params["ff_w"], params["ff_b"], params["ff_g"], params["ff_beta"])
    ff2 = lambda t: ffn(t, params["ff2_w"], params["ff2_b"], params["ff2_g"], params["ff2_beta"])

    c_his2utt = ff1(attn(utterance, history, history))
    c_utt2his = ff1(attn(history, utterance, utterance))
    c_his2resp = ff1(attn(response, history, history))
    c_resp2hist = ff1(attn(history, response, response))
    c_utt2resp = ff1(attn(utterance, response, response))
    c_resp2utt = ff1(attn(response, utterance, utterance))
    sa_h = attn(history, history, history)
    sa_u = attn(utterance, utterance, utterance)
    sa_r = attn(response, response, response)
    hw_h = highway(jnp.concatenate([history, c_utt2his, c_resp2hist, sa_h], -1), params["highway"])
    hw_u = highway(jnp.concatenate([utterance, c_his2utt, c_resp2utt, sa_u], -1), params["highway"])
    hw_r = highway(jnp.concatenate([response, c_his2resp, c_utt2resp, sa_r], -1), params["highway"])
    return ff2(hw_h), ff2(hw_u), ff2(hw_r)


# ----------------------------------------------------------------------------
if __name__ == "__main__":
    B, L, H = 2, 8, 32   # batch, sequence length, hidden_size (4H = 128 lanes)

    key = jax.random.PRNGKey(0)
    k_hist, k_utt, k_resp, k_params = jax.random.split(key, 4)
    history = jax.random.normal(k_hist, (B, L, H), jnp.float32)
    utterance = jax.random.normal(k_utt, (B, L, H), jnp.float32)
    response = jax.random.normal(k_resp, (B, L, H), jnp.float32)

    params = init_params(k_params, H)
    kparams = prepare_kernel_params(params)

    outs = triple_attention_highway(kparams, history, utterance, response)
    jax.block_until_ready(outs)

    refs = reference(params, history, utterance, response)
    for o, r in zip(outs, refs):
        assert o.shape == (B, L, H), o.shape
        assert bool(jnp.all(jnp.isfinite(o)))
        # bf16 MXU operands + approx reciprocal -> compare at matched precision.
        assert bool(jnp.allclose(o, r, atol=2e-2, rtol=2e-2)), \
            float(jnp.max(jnp.abs(o - r)))

    print("KERNEL_OK")
</pallas_src>

<mosaic_0001>
module attributes {stable_mosaic.version = 11 : i64} {
  func.func @_fused_kernel(%arg0: i32, %arg1: memref<3xi32, #tpu.memory_space<smem>>, %arg2: memref<3xi32, #tpu.memory_space<smem>>, %arg3: memref<3xi32, #tpu.memory_space<smem>>, %arg4: memref<3x2x8x32xf32, #tpu.memory_space<vmem>>, %arg5: memref<32x32xbf16, #tpu.memory_space<vmem>>, %arg6: memref<1x32xf32, #tpu.memory_space<vmem>>, %arg7: memref<1x32xf32, #tpu.memory_space<vmem>>, %arg8: memref<1x32xf32, #tpu.memory_space<vmem>>, %arg9: memref<128x256xbf16, #tpu.memory_space<vmem>>, %arg10: memref<1x256xf32, #tpu.memory_space<vmem>>, %arg11: memref<128x256xbf16, #tpu.memory_space<vmem>>, %arg12: memref<1x256xf32, #tpu.memory_space<vmem>>, %arg13: memref<128x32xbf16, #tpu.memory_space<vmem>>, %arg14: memref<1x32xf32, #tpu.memory_space<vmem>>, %arg15: memref<1x32xf32, #tpu.memory_space<vmem>>, %arg16: memref<1x32xf32, #tpu.memory_space<vmem>>, %arg17: memref<1x2x8x32xf32, #tpu.memory_space<vmem>>) attributes {dimension_semantics = [#tpu.dimension_semantics<parallel>], iteration_bounds = array<i64: 3>, scalar_prefetch = 3 : i64, scratch_operands = 0 : i64, tpu.core_type = #tpu.core_type<tc>, window_params = [{pipeline_mode = #tpu.pipeline_mode<synchronous>, transform_indices = @transform_0, window_bounds = array<i64: 3, 2, 8, 32>}, {pipeline_mode = #tpu.pipeline_mode<synchronous>, transform_indices = @transform_1, window_bounds = array<i64: 32, 32>}, {pipeline_mode = #tpu.pipeline_mode<synchronous>, transform_indices = @transform_2, window_bounds = array<i64: 1, 32>}, {pipeline_mode = #tpu.pipeline_mode<synchronous>, transform_indices = @transform_3, window_bounds = array<i64: 1, 32>}, {pipeline_mode = #tpu.pipeline_mode<synchronous>, transform_indices = @transform_4, window_bounds = array<i64: 1, 32>}, {pipeline_mode = #tpu.pipeline_mode<synchronous>, transform_indices = @transform_5, window_bounds = array<i64: 128, 256>}, {pipeline_mode = #tpu.pipeline_mode<synchronous>, transform_indices = @transform_6, window_bounds = array<i64: 1, 256>}, {pipeline_mode = #tpu.pipeline_mode<synchronous>, transform_indices = @transform_7, window_bounds = array<i64: 128, 256>}, {pipeline_mode = #tpu.pipeline_mode<synchronous>, transform_indices = @transform_8, window_bounds = array<i64: 1, 256>}, {pipeline_mode = #tpu.pipeline_mode<synchronous>, transform_indices = @transform_9, window_bounds = array<i64: 128, 32>}, {pipeline_mode = #tpu.pipeline_mode<synchronous>, transform_indices = @transform_10, window_bounds = array<i64: 1, 32>}, {pipeline_mode = #tpu.pipeline_mode<synchronous>, transform_indices = @transform_11, window_bounds = array<i64: 1, 32>}, {pipeline_mode = #tpu.pipeline_mode<synchronous>, transform_indices = @transform_12, window_bounds = array<i64: 1, 32>}, {transform_indices = @transform_13, window_bounds = array<i64: 1, 2, 8, 32>}]} {
    %0 = arith.index_cast %arg0 : i32 to index
    %c0 = arith.constant 0 : index
    %c0_0 = arith.constant 0 : index
    %c0_1 = arith.constant 0 : index
    %1 = vector.load %arg4[%0, %c0, %c0_0, %c0_1] : memref<3x2x8x32xf32, #tpu.memory_space<vmem>>, vector<1x2x8x32xf32>
    %2 = vector.shape_cast %1 : vector<1x2x8x32xf32> to vector<2x8x32xf32>
    %3 = arith.index_cast %arg0 : i32 to index
    %4 = memref.load %arg1[%3] : memref<3xi32, #tpu.memory_space<smem>>
    %5 = arith.index_cast %4 : i32 to index
    %c0_2 = arith.constant 0 : index
    %c0_3 = arith.constant 0 : index
    %c0_4 = arith.constant 0 : index
    %6 = vector.load %arg4[%5, %c0_2, %c0_3, %c0_4] : memref<3x2x8x32xf32, #tpu.memory_space<vmem>>, vector<1x2x8x32xf32>
    %7 = vector.shape_cast %6 : vector<1x2x8x32xf32> to vector<2x8x32xf32>
    %8 = arith.index_cast %arg0 : i32 to index
    %9 = memref.load %arg2[%8] : memref<3xi32, #tpu.memory_space<smem>>
    %10 = arith.index_cast %9 : i32 to index
    %c0_5 = arith.constant 0 : index
    %c0_6 = arith.constant 0 : index
    %c0_7 = arith.constant 0 : index
    %11 = vector.load %arg4[%10, %c0_5, %c0_6, %c0_7] : memref<3x2x8x32xf32, #tpu.memory_space<vmem>>, vector<1x2x8x32xf32>
    %12 = vector.shape_cast %11 : vector<1x2x8x32xf32> to vector<2x8x32xf32>
    %13 = arith.index_cast %arg0 : i32 to index
    %14 = memref.load %arg3[%13] : memref<3xi32, #tpu.memory_space<smem>>
    %15 = arith.index_cast %14 : i32 to index
    %c0_8 = arith.constant 0 : index
    %c0_9 = arith.constant 0 : index
    %c0_10 = arith.constant 0 : index
    %16 = vector.load %arg4[%15, %c0_8, %c0_9, %c0_10] : memref<3x2x8x32xf32, #tpu.memory_space<vmem>>, vector<1x2x8x32xf32>
    %17 = vector.shape_cast %16 : vector<1x2x8x32xf32> to vector<2x8x32xf32>
    %cst = arith.constant 0.176776692 : f32
    %18 = vector.broadcast %cst : f32 to vector<2x8x32xf32>
    %19 = arith.mulf %2, %18 : vector<2x8x32xf32>
    %20 = arith.truncf %19 : vector<2x8x32xf32> to vector<2x8x32xbf16>
    %cst_11 = arith.constant 0.176776692 : f32
    %21 = vector.broadcast %cst_11 : f32 to vector<2x8x32xf32>
    %22 = arith.mulf %12, %21 : vector<2x8x32xf32>
    %23 = arith.truncf %22 : vector<2x8x32xf32> to vector<2x8x32xbf16>
    %24 = arith.truncf %7 : vector<2x8x32xf32> to vector<2x8x32xbf16>
    "tpu.trace_start"() <{level = 10 : i32, message = "bqd,bkd->bqk"}> : () -> ()
    %cst_12 = arith.constant dense<0.000000e+00> : vector<2x8x8xf32>
    %25 = tpu.matmul %20, %24, %cst_12 {dimension_numbers = #tpu.dot_dimension_numbers<[2], [2], [1], [1], [0, 0, 0, 1, 1, 1], [0], [0]>} : vector<2x8x32xbf16>, vector<2x8x32xbf16>, vector<2x8x8xf32> -> vector<2x8x8xf32>
    "tpu.trace_stop"() : () -> ()
    %cst_13 = arith.constant dense<0xFF800000> : vector<2x8xf32>
    %26 = vector.multi_reduction <maximumf>, %25, %cst_13 [2] : vector<2x8x8xf32> to vector<2x8xf32>
    %27 = vector.shape_cast %26 : vector<2x8xf32> to vector<2x8x1xf32>
    %28 = vector.broadcast %27 : vector<2x8x1xf32> to vector<2x8x8xf32>
    %29 = arith.subf %25, %28 : vector<2x8x8xf32>
    %30 = math.exp %29 : vector<2x8x8xf32>
    %cst_14 = arith.constant dense<0.000000e+00> : vector<2x8xf32>
    %31 = vector.multi_reduction <add>, %30, %cst_14 [2] : vector<2x8x8xf32> to vector<2x8xf32>
    %32 = vector.shape_cast %31 : vector<2x8xf32> to vector<2x8x1xf32>
    %33 = arith.truncf %30 : vector<2x8x8xf32> to vector<2x8x8xbf16>
    "tpu.trace_start"() <{level = 10 : i32, message = "bqk,bkd->bqd"}> : () -> ()
    %cst_15 = arith.constant dense<0.000000e+00> : vector<2x8x32xf32>
    %34 = tpu.matmul %33, %24, %cst_15 {dimension_numbers = #tpu.dot_dimension_numbers<[2], [1], [1], [2], [0, 0, 0, 1, 1, 2], [0], [0]>} : vector<2x8x8xbf16>, vector<2x8x32xbf16>, vector<2x8x32xf32> -> vector<2x8x32xf32>
    "tpu.trace_stop"() : () -> ()
    %35 = tpu.reciprocal %32 {approx = true} : vector<2x8x1xf32> -> vector<2x8x1xf32>
    %36 = vector.broadcast %35 : vector<2x8x1xf32> to vector<2x8x32xf32>
    %37 = arith.mulf %34, %36 : vector<2x8x32xf32>
    %38 = vector.shape_cast %37 : vector<2x8x32xf32> to vector<16x32xf32>
    %39 = arith.truncf %17 : vector<2x8x32xf32> to vector<2x8x32xbf16>
    "tpu.trace_start"() <{level = 10 : i32, message = "bqd,bkd->bqk"}> : () -> ()
    %cst_16 = arith.constant dense<0.000000e+00> : vector<2x8x8xf32>
    %40 = tpu.matmul %23, %39, %cst_16 {dimension_numbers = #tpu.dot_dimension_numbers<[2], [2], [1], [1], [0, 0, 0, 1, 1, 1], [0], [0]>} : vector<2x8x32xbf16>, vector<2x8x32xbf16>, vector<2x8x8xf32> -> vector<2x8x8xf32>
    "tpu.trace_stop"() : () -> ()
    %cst_17 = arith.constant dense<0xFF800000> : vector<2x8xf32>
    %41 = vector.multi_reduction <maximumf>, %40, %cst_17 [2] : vector<2x8x8xf32> to vector<2x8xf32>
    %42 = vector.shape_cast %41 : vector<2x8xf32> to vector<2x8x1xf32>
    %43 = vector.broadcast %42 : vector<2x8x1xf32> to vector<2x8x8xf32>
    %44 = arith.subf %40, %43 : vector<2x8x8xf32>
    %45 = math.exp %44 : vector<2x8x8xf32>
    %cst_18 = arith.constant dense<0.000000e+00> : vector<2x8xf32>
    %46 = vector.multi_reduction <add>, %45, %cst_18 [2] : vector<2x8x8xf32> to vector<2x8xf32>
    %47 = vector.shape_cast %46 : vector<2x8xf32> to vector<2x8x1xf32>
    %48 = arith.truncf %45 : vector<2x8x8xf32> to vector<2x8x8xbf16>
    "tpu.trace_start"() <{level = 10 : i32, message = "bqk,bkd->bqd"}> : () -> ()
    %cst_19 = arith.constant dense<0.000000e+00> : vector<2x8x32xf32>
    %49 = tpu.matmul %48, %39, %cst_19 {dimension_numbers = #tpu.dot_dimension_numbers<[2], [1], [1], [2], [0, 0, 0, 1, 1, 2], [0], [0]>} : vector<2x8x8xbf16>, vector<2x8x32xbf16>, vector<2x8x32xf32> -> vector<2x8x32xf32>
    "tpu.trace_stop"() : () -> ()
    %50 = tpu.reciprocal %47 {approx = true} : vector<2x8x1xf32> -> vector<2x8x1xf32>
    %51 = vector.broadcast %50 : vector<2x8x1xf32> to vector<2x8x32xf32>
    %52 = arith.mulf %49, %51 : vector<2x8x32xf32>
    %53 = vector.shape_cast %52 : vector<2x8x32xf32> to vector<16x32xf32>
    %54 = arith.truncf %2 : vector<2x8x32xf32> to vector<2x8x32xbf16>
    "tpu.trace_start"() <{level = 10 : i32, message = "bqd,bkd->bqk"}> : () -> ()
    %cst_20 = arith.constant dense<0.000000e+00> : vector<2x8x8xf32>
    %55 = tpu.matmul %20, %54, %cst_20 {dimension_numbers = #tpu.dot_dimension_numbers<[2], [2], [1], [1], [0, 0, 0, 1, 1, 1], [0], [0]>} : vector<2x8x32xbf16>, vector<2x8x32xbf16>, vector<2x8x8xf32> -> vector<2x8x8xf32>
    "tpu.trace_stop"() : () -> ()
    %cst_21 = arith.constant dense<0xFF800000> : vector<2x8xf32>
    %56 = vector.multi_reduction <maximumf>, %55, %cst_21 [2] : vector<2x8x8xf32> to vector<2x8xf32>
    %57 = vector.shape_cast %56 : vector<2x8xf32> to vector<2x8x1xf32>
    %58 = vector.broadcast %57 : vector<2x8x1xf32> to vector<2x8x8xf32>
    %59 = arith.subf %55, %58 : vector<2x8x8xf32>
    %60 = math.exp %59 : vector<2x8x8xf32>
    %cst_22 = arith.constant dense<0.000000e+00> : vector<2x8xf32>
    %61 = vector.multi_reduction <add>, %60, %cst_22 [2] : vector<2x8x8xf32> to vector<2x8xf32>
    %62 = vector.shape_cast %61 : vector<2x8xf32> to vector<2x8x1xf32>
    %63 = arith.truncf %60 : vector<2x8x8xf32> to vector<2x8x8xbf16>
    "tpu.trace_start"() <{level = 10 : i32, message = "bqk,bkd->bqd"}> : () -> ()
    %cst_23 = arith.constant dense<0.000000e+00> : vector<2x8x32xf32>
    %64 = tpu.matmul %63, %54, %cst_23 {dimension_numbers = #tpu.dot_dimension_numbers<[2], [1], [1], [2], [0, 0, 0, 1, 1, 2], [0], [0]>} : vector<2x8x8xbf16>, vector<2x8x32xbf16>, vector<2x8x32xf32> -> vector<2x8x32xf32>
    "tpu.trace_stop"() : () -> ()
    %65 = tpu.reciprocal %62 {approx = true} : vector<2x8x1xf32> -> vector<2x8x1xf32>
    %66 = vector.broadcast %65 : vector<2x8x1xf32> to vector<2x8x32xf32>
    %67 = arith.mulf %64, %66 : vector<2x8x32xf32>
    %68 = vector.shape_cast %67 : vector<2x8x32xf32> to vector<16x32xf32>
    %69 = tpu.concatenate %38, %53 in 0 : vector<16x32xf32>, vector<16x32xf32> -> vector<32x32xf32>
    %70 = arith.truncf %69 : vector<32x32xf32> to vector<32x32xbf16>
    %c0_24 = arith.constant 0 : index
    %c0_25 = arith.constant 0 : index
    %71 = vector.load %arg5[%c0_24, %c0_25] : memref<32x32xbf16, #tpu.memory_space<vmem>>, vector<32x32xbf16>
    %cst_26 = arith.constant dense<0.000000e+00> : vector<32x32xf32>
    %72 = tpu.matmul %70, %71, %cst_26 {dimension_numbers = #tpu.dot_dimension_numbers<[1], [0], [0], [1], [0, 0, 1, 1], [], []>} : vector<32x32xbf16>, vector<32x32xbf16>, vector<32x32xf32> -> vector<32x32xf32>
    %c0_27 = arith.constant 0 : index
    %c0_28 = arith.constant 0 : index
    %73 = vector.load %arg6[%c0_27, %c0_28] : memref<1x32xf32, #tpu.memory_space<vmem>>, vector<1x32xf32>
    %74 = vector.broadcast %73 : vector<1x32xf32> to vector<32x32xf32>
    %75 = arith.addf %72, %74 : vector<32x32xf32>
    %cst_29 = arith.constant 0.000000e+00 : f32
    %76 = vector.broadcast %cst_29 : f32 to vector<32x32xf32>
    %77 = arith.maximumf %75, %76 : vector<32x32xf32>
    %c0_30 = arith.constant 0 : index
    %c0_31 = arith.constant 0 : index
    %78 = vector.load %arg7[%c0_30, %c0_31] : memref<1x32xf32, #tpu.memory_space<vmem>>, vector<1x32xf32>
    %c0_32 = arith.constant 0 : index
    %c0_33 = arith.constant 0 : index
    %79 = vector.load %arg8[%c0_32, %c0_33] : memref<1x32xf32, #tpu.memory_space<vmem>>, vector<1x32xf32>
    %cst_34 = arith.constant dense<0.000000e+00> : vector<32xf32>
    %80 = vector.multi_reduction <add>, %77, %cst_34 [1] : vector<32x32xf32> to vector<32xf32>
    %81 = vector.shape_cast %80 : vector<32xf32> to vector<32x1xf32>
    %cst_35 = arith.constant 3.200000e+01 : f32
    %82 = vector.broadcast %cst_35 : f32 to vector<32x1xf32>
    %83 = arith.divf %81, %82 : vector<32x1xf32>
    %84 = arith.mulf %77, %77 : vector<32x32xf32>
    %cst_36 = arith.constant dense<0.000000e+00> : vector<32xf32>
    %85 = vector.multi_reduction <add>, %84, %cst_36 [1] : vector<32x32xf32> to vector<32xf32>
    %86 = vector.shape_cast %85 : vector<32xf32> to vector<32x1xf32>
    %cst_37 = arith.constant 3.200000e+01 : f32
    %87 = vector.broadcast %cst_37 : f32 to vector<32x1xf32>
    %88 = arith.divf %86, %87 : vector<32x1xf32>
    %89 = arith.mulf %83, %83 : vector<32x1xf32>
    %90 = arith.subf %88, %89 : vector<32x1xf32>
    %cst_38 = arith.constant 0.000000e+00 : f32
    %91 = vector.broadcast %cst_38 : f32 to vector<32x1xf32>
    %92 = arith.maximumf %90, %91 : vector<32x1xf32>
    %93 = vector.broadcast %83 : vector<32x1xf32> to vector<32x32xf32>
    %94 = arith.subf %77, %93 : vector<32x32xf32>
    %cst_39 = arith.constant 9.99999974E-6 : f32
    %95 = vector.broadcast %cst_39 : f32 to vector<32x1xf32>
    %96 = arith.addf %92, %95 : vector<32x1xf32>
    %97 = math.rsqrt %96 : vector<32x1xf32>
    %98 = vector.broadcast %97 : vector<32x1xf32> to vector<32x32xf32>
    %99 = arith.mulf %94, %98 : vector<32x32xf32>
    %100 = vector.broadcast %78 : vector<1x32xf32> to vector<32x32xf32>
    %101 = arith.mulf %99, %100 : vector<32x32xf32>
    %102 = vector.broadcast %79 : vector<1x32xf32> to vector<32x32xf32>
    %103 = arith.addf %101, %102 : vector<32x32xf32>
    %104 = vector.extract_strided_slice %103 {offsets = [0, 0], sizes = [16, 32], strides = [1, 1]} : vector<32x32xf32> to vector<16x32xf32>
    %105 = vector.extract_strided_slice %103 {offsets = [16, 0], sizes = [16, 32], strides = [1, 1]} : vector<32x32xf32> to vector<16x32xf32>
    %106 = vector.shape_cast %2 : vector<2x8x32xf32> to vector<16x32xf32>
    %107 = tpu.concatenate %106, %104, %105, %68 in 1 : vector<16x32xf32>, vector<16x32xf32>, vector<16x32xf32>, vector<16x32xf32> -> vector<16x128xf32>
    %108 = arith.truncf %107 : vector<16x128xf32> to vector<16x128xbf16>
    %c0_40 = arith.constant 0 : index
    %c0_41 = arith.constant 0 : index
    %109 = vector.load %arg9[%c0_40, %c0_41] : memref<128x256xbf16, #tpu.memory_space<vmem>>, vector<128x256xbf16>
    %cst_42 = arith.constant dense<0.000000e+00> : vector<16x256xf32>
    %110 = tpu.matmul %108, %109, %cst_42 {dimension_numbers = #tpu.dot_dimension_numbers<[1], [0], [0], [1], [0, 0, 1, 1], [], []>} : vector<16x128xbf16>, vector<128x256xbf16>, vector<16x256xf32> -> vector<16x256xf32>
    %c0_43 = arith.constant 0 : index
    %c0_44 = arith.constant 0 : index
    %111 = vector.load %arg10[%c0_43, %c0_44] : memref<1x256xf32, #tpu.memory_space<vmem>>, vector<1x256xf32>
    %112 = vector.broadcast %111 : vector<1x256xf32> to vector<16x256xf32>
    %113 = arith.addf %110, %112 : vector<16x256xf32>
    %114 = vector.extract_strided_slice %113 {offsets = [0, 0], sizes = [16, 128], strides = [1, 1]} : vector<16x256xf32> to vector<16x128xf32>
    %115 = arith.negf %114 : vector<16x128xf32>
    %116 = math.exp %115 : vector<16x128xf32>
    %cst_45 = arith.constant 1.000000e+00 : f32
    %117 = vector.broadcast %cst_45 : f32 to vector<16x128xf32>
    %118 = arith.addf %117, %116 : vector<16x128xf32>
    %119 = arith.divf %117, %118 : vector<16x128xf32>
    %120 = vector.extract_strided_slice %113 {offsets = [0, 128], sizes = [16, 128], strides = [1, 1]} : vector<16x256xf32> to vector<16x128xf32>
    %cst_46 = arith.constant 0.000000e+00 : f32
    %121 = vector.broadcast %cst_46 : f32 to vector<16x128xf32>
    %122 = arith.maximumf %120, %121 : vector<16x128xf32>
    %123 = arith.subf %122, %107 : vector<16x128xf32>
    %124 = arith.mulf %119, %123 : vector<16x128xf32>
    %125 = arith.addf %124, %107 : vector<16x128xf32>
    %126 = arith.truncf %125 : vector<16x128xf32> to vector<16x128xbf16>
    %c0_47 = arith.constant 0 : index
    %c0_48 = arith.constant 0 : index
    %127 = vector.load %arg11[%c0_47, %c0_48] : memref<128x256xbf16, #tpu.memory_space<vmem>>, vector<128x256xbf16>
    %cst_49 = arith.constant dense<0.000000e+00> : vector<16x256xf32>
    %128 = tpu.matmul %126, %127, %cst_49 {dimension_numbers = #tpu.dot_dimension_numbers<[1], [0], [0], [1], [0, 0, 1, 1], [], []>} : vector<16x128xbf16>, vector<128x256xbf16>, vector<16x256xf32> -> vector<16x256xf32>
    %c0_50 = arith.constant 0 : index
    %c0_51 = arith.constant 0 : index
    %129 = vector.load %arg12[%c0_50, %c0_51] : memref<1x256xf32, #tpu.memory_space<vmem>>, vector<1x256xf32>
    %130 = vector.broadcast %129 : vector<1x256xf32> to vector<16x256xf32>
    %131 = arith.addf %128, %130 : vector<16x256xf32>
    %132 = vector.extract_strided_slice %131 {offsets = [0, 0], sizes = [16, 128], strides = [1, 1]} : vector<16x256xf32> to vector<16x128xf32>
    %133 = arith.negf %132 : vector<16x128xf32>
    %134 = math.exp %133 : vector<16x128xf32>
    %cst_52 = arith.constant 1.000000e+00 : f32
    %135 = vector.broadcast %cst_52 : f32 to vector<16x128xf32>
    %136 = arith.addf %135, %134 : vector<16x128xf32>
    %137 = arith.divf %135, %136 : vector<16x128xf32>
    %138 = vector.extract_strided_slice %131 {offsets = [0, 128], sizes = [16, 128], strides = [1, 1]} : vector<16x256xf32> to vector<16x128xf32>
    %cst_53 = arith.constant 0.000000e+00 : f32
    %139 = vector.broadcast %cst_53 : f32 to vector<16x128xf32>
    %140 = arith.maximumf %138, %139 : vector<16x128xf32>
    %141 = arith.subf %140, %125 : vector<16x128xf32>
    %142 = arith.mulf %137, %141 : vector<16x128xf32>
    %143 = arith.addf %142, %125 : vector<16x128xf32>
    %144 = arith.truncf %143 : vector<16x128xf32> to vector<16x128xbf16>
    %c0_54 = arith.constant 0 : index
    %c0_55 = arith.constant 0 : index
    %145 = vector.load %arg13[%c0_54, %c0_55] : memref<128x32xbf16, #tpu.memory_space<vmem>>, vector<128x32xbf16>
    %cst_56 = arith.constant dense<0.000000e+00> : vector<16x32xf32>
    %146 = tpu.matmul %144, %145, %cst_56 {dimension_numbers = #tpu.dot_dimension_numbers<[1], [0], [0], [1], [0, 0, 1, 1], [], []>} : vector<16x128xbf16>, vector<128x32xbf16>, vector<16x32xf32> -> vector<16x32xf32>
    %c0_57 = arith.constant 0 : index
    %c0_58 = arith.constant 0 : index
    %147 = vector.load %arg14[%c0_57, %c0_58] : memref<1x32xf32, #tpu.memory_space<vmem>>, vector<1x32xf32>
    %148 = vector.broadcast %147 : vector<1x32xf32> to vector<16x32xf32>
    %149 = arith.addf %146, %148 : vector<16x32xf32>
    %cst_59 = arith.constant 0.000000e+00 : f32
    %150 = vector.broadcast %cst_59 : f32 to vector<16x32xf32>
    %151 = arith.maximumf %149, %150 : vector<16x32xf32>
    %c0_60 = arith.constant 0 : index
    %c0_61 = arith.constant 0 : index
    %152 = vector.load %arg15[%c0_60, %c0_61] : memref<1x32xf32, #tpu.memory_space<vmem>>, vector<1x32xf32>
    %c0_62 = arith.constant 0 : index
    %c0_63 = arith.constant 0 : index
    %153 = vector.load %arg16[%c0_62, %c0_63] : memref<1x32xf32, #tpu.memory_space<vmem>>, vector<1x32xf32>
    %cst_64 = arith.constant dense<0.000000e+00> : vector<16xf32>
    %154 = vector.multi_reduction <add>, %151, %cst_64 [1] : vector<16x32xf32> to vector<16xf32>
    %155 = vector.shape_cast %154 : vector<16xf32> to vector<16x1xf32>
    %cst_65 = arith.constant 3.200000e+01 : f32
    %156 = vector.broadcast %cst_65 : f32 to vector<16x1xf32>
    %157 = arith.divf %155, %156 : vector<16x1xf32>
    %158 = arith.mulf %151, %151 : vector<16x32xf32>
    %cst_66 = arith.constant dense<0.000000e+00> : vector<16xf32>
    %159 = vector.multi_reduction <add>, %158, %cst_66 [1] : vector<16x32xf32> to vector<16xf32>
    %160 = vector.shape_cast %159 : vector<16xf32> to vector<16x1xf32>
    %cst_67 = arith.constant 3.200000e+01 : f32
    %161 = vector.broadcast %cst_67 : f32 to vector<16x1xf32>
    %162 = arith.divf %160, %161 : vector<16x1xf32>
    %163 = arith.mulf %157, %157 : vector<16x1xf32>
    %164 = arith.subf %162, %163 : vector<16x1xf32>
    %cst_68 = arith.constant 0.000000e+00 : f32
    %165 = vector.broadcast %cst_68 : f32 to vector<16x1xf32>
    %166 = arith.maximumf %164, %165 : vector<16x1xf32>
    %167 = vector.broadcast %157 : vector<16x1xf32> to vector<16x32xf32>
    %168 = arith.subf %151, %167 : vector<16x32xf32>
    %cst_69 = arith.constant 9.99999974E-6 : f32
    %169 = vector.broadcast %cst_69 : f32 to vector<16x1xf32>
    %170 = arith.addf %166, %169 : vector<16x1xf32>
    %171 = math.rsqrt %170 : vector<16x1xf32>
    %172 = vector.broadcast %171 : vector<16x1xf32> to vector<16x32xf32>
    %173 = arith.mulf %168, %172 : vector<16x32xf32>
    %174 = vector.broadcast %152 : vector<1x32xf32> to vector<16x32xf32>
    %175 = arith.mulf %173, %174 : vector<16x32xf32>
    %176 = vector.broadcast %153 : vector<1x32xf32> to vector<16x32xf32>
    %177 = arith.addf %175, %176 : vector<16x32xf32>
    %178 = vector.shape_cast %177 : vector<16x32xf32> to vector<2x8x32xf32>
    %c0_70 = arith.constant 0 : index
    %c0_71 = arith.constant 0 : index
    %c0_72 = arith.constant 0 : index
    %c0_73 = arith.constant 0 : index
    %179 = vector.load %arg17[%c0_70, %c0_71, %c0_72, %c0_73] : memref<1x2x8x32xf32, #tpu.memory_space<vmem>>, vector<1x2x8x32xf32>
    %180 = vector.shape_cast %179 : vector<1x2x8x32xf32> to vector<2x8x32xf32>
    %181 = vector.shape_cast %178 : vector<2x8x32xf32> to vector<1x2x8x32xf32>
    tpu.vector_store %arg17[%c0_70, %c0_71, %c0_72, %c0_73], %181 {strides = array<i32>} : memref<1x2x8x32xf32, #tpu.memory_space<vmem>>, vector<1x2x8x32xf32>,
    return
  }
  func.func @transform_0(%arg0: i32, %arg1: memref<3xi32, #tpu.memory_space<smem>>, %arg2: memref<3xi32, #tpu.memory_space<smem>>, %arg3: memref<3xi32, #tpu.memory_space<smem>>) -> (i32, i32, i32, i32) {
    %c0_i32 = arith.constant 0 : i32
    %c0_i32_0 = arith.constant 0 : i32
    %c0_i32_1 = arith.constant 0 : i32
    %c0_i32_2 = arith.constant 0 : i32
    %c0_i32_3 = arith.constant 0 : i32
    return %c0_i32, %c0_i32_0, %c0_i32_1, %c0_i32_2 : i32, i32, i32, i32
  }
  func.func @transform_1(%arg0: i32, %arg1: memref<3xi32, #tpu.memory_space<smem>>, %arg2: memref<3xi32, #tpu.memory_space<smem>>, %arg3: memref<3xi32, #tpu.memory_space<smem>>) -> (i32, i32) {
    %c0_i32 = arith.constant 0 : i32
    %c0_i32_0 = arith.constant 0 : i32
    %c0_i32_1 = arith.constant 0 : i32
    return %c0_i32, %c0_i32_0 : i32, i32
  }
  func.func @transform_2(%arg0: i32, %arg1: memref<3xi32, #tpu.memory_space<smem>>, %arg2: memref<3xi32, #tpu.memory_space<smem>>, %arg3: memref<3xi32, #tpu.memory_space<smem>>) -> (i32, i32) {
    %c0_i32 = arith.constant 0 : i32
    %c0_i32_0 = arith.constant 0 : i32
    %c0_i32_1 = arith.constant 0 : i32
    return %c0_i32, %c0_i32_0 : i32, i32
  }
  func.func @transform_3(%arg0: i32, %arg1: memref<3xi32, #tpu.memory_space<smem>>, %arg2: memref<3xi32, #tpu.memory_space<smem>>, %arg3: memref<3xi32, #tpu.memory_space<smem>>) -> (i32, i32) {
    %c0_i32 = arith.constant 0 : i32
    %c0_i32_0 = arith.constant 0 : i32
    %c0_i32_1 = arith.constant 0 : i32
    return %c0_i32, %c0_i32_0 : i32, i32
  }
  func.func @transform_4(%arg0: i32, %arg1: memref<3xi32, #tpu.memory_space<smem>>, %arg2: memref<3xi32, #tpu.memory_space<smem>>, %arg3: memref<3xi32, #tpu.memory_space<smem>>) -> (i32, i32) {
    %c0_i32 = arith.constant 0 : i32
    %c0_i32_0 = arith.constant 0 : i32
    %c0_i32_1 = arith.constant 0 : i32
    return %c0_i32, %c0_i32_0 : i32, i32
  }
  func.func @transform_5(%arg0: i32, %arg1: memref<3xi32, #tpu.memory_space<smem>>, %arg2: memref<3xi32, #tpu.memory_space<smem>>, %arg3: memref<3xi32, #tpu.memory_space<smem>>) -> (i32, i32) {
    %c0_i32 = arith.constant 0 : i32
    %c0_i32_0 = arith.constant 0 : i32
    %c0_i32_1 = arith.constant 0 : i32
    return %c0_i32, %c0_i32_0 : i32, i32
  }
  func.func @transform_6(%arg0: i32, %arg1: memref<3xi32, #tpu.memory_space<smem>>, %arg2: memref<3xi32, #tpu.memory_space<smem>>, %arg3: memref<3xi32, #tpu.memory_space<smem>>) -> (i32, i32) {
    %c0_i32 = arith.constant 0 : i32
    %c0_i32_0 = arith.constant 0 : i32
    %c0_i32_1 = arith.constant 0 : i32
    return %c0_i32, %c0_i32_0 : i32, i32
  }
  func.func @transform_7(%arg0: i32, %arg1: memref<3xi32, #tpu.memory_space<smem>>, %arg2: memref<3xi32, #tpu.memory_space<smem>>, %arg3: memref<3xi32, #tpu.memory_space<smem>>) -> (i32, i32) {
    %c0_i32 = arith.constant 0 : i32
    %c0_i32_0 = arith.constant 0 : i32
    %c0_i32_1 = arith.constant 0 : i32
    return %c0_i32, %c0_i32_0 : i32, i32
  }
  func.func @transform_8(%arg0: i32, %arg1: memref<3xi32, #tpu.memory_space<smem>>, %arg2: memref<3xi32, #tpu.memory_space<smem>>, %arg3: memref<3xi32, #tpu.memory_space<smem>>) -> (i32, i32) {
    %c0_i32 = arith.constant 0 : i32
    %c0_i32_0 = arith.constant 0 : i32
    %c0_i32_1 = arith.constant 0 : i32
    return %c0_i32, %c0_i32_0 : i32, i32
  }
  func.func @transform_9(%arg0: i32, %arg1: memref<3xi32, #tpu.memory_space<smem>>, %arg2: memref<3xi32, #tpu.memory_space<smem>>, %arg3: memref<3xi32, #tpu.memory_space<smem>>) -> (i32, i32) {
    %c0_i32 = arith.constant 0 : i32
    %c0_i32_0 = arith.constant 0 : i32
    %c0_i32_1 = arith.constant 0 : i32
    return %c0_i32, %c0_i32_0 : i32, i32
  }
  func.func @transform_10(%arg0: i32, %arg1: memref<3xi32, #tpu.memory_space<smem>>, %arg2: memref<3xi32, #tpu.memory_space<smem>>, %arg3: memref<3xi32, #tpu.memory_space<smem>>) -> (i32, i32) {
    %c0_i32 = arith.constant 0 : i32
    %c0_i32_0 = arith.constant 0 : i32
    %c0_i32_1 = arith.constant 0 : i32
    return %c0_i32, %c0_i32_0 : i32, i32
  }
  func.func @transform_11(%arg0: i32, %arg1: memref<3xi32, #tpu.memory_space<smem>>, %arg2: memref<3xi32, #tpu.memory_space<smem>>, %arg3: memref<3xi32, #tpu.memory_space<smem>>) -> (i32, i32) {
    %c0_i32 = arith.constant 0 : i32
    %c0_i32_0 = arith.constant 0 : i32
    %c0_i32_1 = arith.constant 0 : i32
    return %c0_i32, %c0_i32_0 : i32, i32
  }
  func.func @transform_12(%arg0: i32, %arg1: memref<3xi32, #tpu.memory_space<smem>>, %arg2: memref<3xi32, #tpu.memory_space<smem>>, %arg3: memref<3xi32, #tpu.memory_space<smem>>) -> (i32, i32) {
    %c0_i32 = arith.constant 0 : i32
    %c0_i32_0 = arith.constant 0 : i32
    %c0_i32_1 = arith.constant 0 : i32
    return %c0_i32, %c0_i32_0 : i32, i32
  }
  func.func @transform_13(%arg0: i32, %arg1: memref<3xi32, #tpu.memory_space<smem>>, %arg2: memref<3xi32, #tpu.memory_space<smem>>, %arg3: memref<3xi32, #tpu.memory_space<smem>>) -> (i32, i32, i32, i32) {
    %c0_i32 = arith.constant 0 : i32
    %c0_i32_0 = arith.constant 0 : i32
    %c0_i32_1 = arith.constant 0 : i32
    %c0_i32_2 = arith.constant 0 : i32
    return %arg0, %c0_i32, %c0_i32_0, %c0_i32_1 : i32, i32, i32, i32
  }
}

</mosaic_0001>

<llo_original>
// kernel: triple_attention_highway.1
$region0: #{triple_attention_highway.1}
  #allocation0 [shape = 'u32[]', space=smem, size = 0x4, offset = 0x4, fixed_abs, tag = 'smem constant byte address 0x4 - core index']
  #allocation1 [shape = 'u32[144,128]{1,0:T(1,128)}', space=vmem, size = 0x12000, scoped, tag = 'internal scratch']
  #allocation2 [shape = 's32[1]{0}', space=sflag, size = 0x4, scoped, tag = 'scoped memory for triple_attention_highway.1']
  #allocation3 [shape = 'u8[512]{0}', space=smem, size = 0x200, scoped, tag = 'prefetched SMEM operand 0']
  #allocation4 [shape = 'u8[512]{0}', space=smem, size = 0x200, scoped, tag = 'prefetched SMEM operand 1']
  #allocation5 [shape = 'u8[512]{0}', space=smem, size = 0x200, scoped, tag = 'prefetched SMEM operand 2']
  %s0 = inlined_call_operand.vmem [shape: s32[3], index: 0, kind: input, shape index: {}]
  %s1 = inlined_call_operand.vmem [shape: s32[3], index: 1, kind: input, shape index: {}]
  %s2 = inlined_call_operand.vmem [shape: s32[3], index: 2, kind: input, shape index: {}]
  %s3 = inlined_call_operand.vmem [shape: f32[3,2,8,32], index: 3, kind: input, shape index: {}]
  %s4 = inlined_call_operand.vmem [shape: bf16[32,32], index: 4, kind: input, shape index: {}]
  %s5 = inlined_call_operand.vmem [shape: f32[1,32], index: 5, kind: input, shape index: {}]
  %s6 = inlined_call_operand.vmem [shape: f32[1,32], index: 6, kind: input, shape index: {}]
  %s7 = inlined_call_operand.vmem [shape: f32[1,32], index: 7, kind: input, shape index: {}]
  %s8 = inlined_call_operand.vmem [shape: bf16[128,256], index: 8, kind: input, shape index: {}]
  %s9 = inlined_call_operand.vmem [shape: f32[1,256], index: 9, kind: input, shape index: {}]
  %s10 = inlined_call_operand.hbm [shape: bf16[128,256], index: 10, kind: input, shape index: {}]
  %s11 = inlined_call_operand.vmem [shape: f32[1,256], index: 11, kind: input, shape index: {}]
  %s12 = inlined_call_operand.vmem [shape: bf16[128,32], index: 12, kind: input, shape index: {}]
  %s13 = inlined_call_operand.vmem [shape: f32[1,32], index: 13, kind: input, shape index: {}]
  %s14 = inlined_call_operand.vmem [shape: f32[1,32], index: 14, kind: input, shape index: {}]
  %s15 = inlined_call_operand.vmem [shape: f32[1,32], index: 15, kind: input, shape index: {}]
  %s16 = inlined_call_operand.vmem [shape: f32[3,2,8,32], index: 16, kind: output, shape index: {}]
  %s17 = sld [smem:[#allocation0]]
  $region89: #{triple_attention_highway.1} parent=0
    _
  %s19 = ssub.s32 1, %s17
  %s20 = scalar_select 0, %s19, %s17
  %s21 = sshll.u32 %s0, 4
  %s22 = int_to_ptr.vmem [resolvable:$true] %s21
  %24 = dma.vmem_to_smem %s22, 16, [#allocation3], [#allocation2]
  %s25 = sshll.u32 %s1, 4
  %s26 = int_to_ptr.vmem [resolvable:$true] %s25
  %28 = dma.vmem_to_smem %s26, 16, [#allocation4], [#allocation2]
  %s29 = sshll.u32 %s2, 4
  %s30 = int_to_ptr.vmem [resolvable:$true] %s29
  %32 = dma.vmem_to_smem %s30, 16, [#allocation5], [#allocation2]
  %33 = dma.done [#allocation2], 48
  %34 = sfence
  $region1: #{triple_attention_highway.1} parent=0
    #allocation6 [shape = 'u8[65536]{0}', space=vmem, size = 0x10000, scoped, tag = 'input window, operand 10, single buffered']
    #allocation7 [shape = 's32[2]{0}', space=sflag, size = 0x8, scoped, tag = 'scoped memory for triple_attention_highway.1']
    %35 = vsyncpa [#allocation7], 0
    loop: start=0, step=1, limit=5
    $region2: #{triple_attention_highway.1} parent=1 // loop_pre_header
      _
    $region3: #{triple_attention_highway.1} parent=1 // loop_header
      %s37 = sphi 0, %s41
      %p38 = scmp.ge.s32.totalorder %s37, 5
      %s45 = sphi 0, %s45
      %s47 = sphi 0, %s45
      %s48 = sphi 0, %s47
      %s62 = sphi 0, %s48
      %s66 = sphi 0, %s66
      %s68 = sphi 0, %s66
      %s69 = sphi 0, %s68
      %s83 = sphi 0, %s69
      %s87 = sphi 0, %s87
      %s89 = sphi 0, %s87
      %s90 = sphi 0, %s89
      %s104 = sphi 0, %s90
      %s108 = sphi 0, %s108
      %s110 = sphi 0, %s108
      %s111 = sphi 0, %s110
      %s125 = sphi 0, %s111
      %s129 = sphi 0, %s129
      %s131 = sphi 0, %s129
      %s132 = sphi 0, %s131
      %s146 = sphi 0, %s132
      %s150 = sphi 0, %s150
      %s152 = sphi 0, %s150
      %s153 = sphi 0, %s152
      %s167 = sphi 0, %s153
      %s171 = sphi 0, %s171
      %s173 = sphi 0, %s171
      %s174 = sphi 0, %s173
      %s188 = sphi 0, %s174
      %s192 = sphi 0, %s192
      %s194 = sphi 0, %s192
      %s195 = sphi 0, %s194
      %s209 = sphi 0, %s195
      %s213 = sphi 0, %s213
      %s215 = sphi 0, %s213
      %s216 = sphi 0, %s215
      %s230 = sphi 0, %s216
      %s234 = sphi 0, %s234
      %s236 = sphi 0, %s234
      %s237 = sphi 0, %s236
      %s251 = sphi 0, %s237
      %s255 = sphi 0, %s255
      %s257 = sphi 0, %s255
      %s258 = sphi 0, %s257
      %s272 = sphi 0, %s258
      %s276 = sphi 0, %s276
      %s278 = sphi 0, %s276
      %s279 = sphi 0, %s278
      %s293 = sphi 0, %s279
      %s297 = sphi 0, %s297
      %s299 = sphi 0, %s297
      %s300 = sphi 0, %s299
      %s314 = sphi 0, %s300
      %s320 = sphi 0, %s322
      %s323 = sphi 0, %s320
      %s324 = sphi 0, %s323
      %s340 = sphi 0, %s324
    $region4: #{triple_attention_highway.1} parent=1 // loop_header_branch
      %40 = sbr.rel (%p38) target = $region8
    $region5: #{triple_attention_highway.1} parent=1 // loop_body
      %s42 = ssub.s32 %s37, 1
      %s43 = ssub.s32 %s37, 2
      %s44 = sadd.s32 %s37, 1
      %s46 = sadd.s32 %s45, 1
      %p49 = scmp.eq.s32.totalorder %s37, 2
      %p50 = scmp.ne.s32.totalorder %s45, %s47
      %p51 = scmp.eq.s32.totalorder %s37, 0
      %p52 = por %p50, %p51
      %p53 = scmp.ne.s32.totalorder %s45, %s47
      %p54 = scmp.eq.s32.totalorder %s42, 2
      %p55 = por %p53, %p54
      %p56 = scmp.ne.s32.totalorder %s47, %s48
      %p57 = scmp.eq.s32.totalorder %s42, 0
      %p58 = por %p56, %p57
      %p59 = scmp.ne.s32.totalorder %s47, %s48
      %p60 = scmp.eq.s32.totalorder %s43, 2
      %p61 = por %p59, %p60
      %p63 = scmp.ne.s32.totalorder %s48, %s62
      %p64 = scmp.eq.s32.totalorder %s43, 0
      %p65 = por %p63, %p64
      %s67 = sadd.s32 %s66, 1
      %p70 = scmp.eq.s32.totalorder %s37, 2
      %p71 = scmp.ne.s32.totalorder %s66, %s68
      %p72 = scmp.eq.s32.totalorder %s37, 0
      %p73 = por %p71, %p72
      %p74 = scmp.ne.s32.totalorder %s66, %s68
      %p75 = scmp.eq.s32.totalorder %s42, 2
      %p76 = por %p74, %p75
      %p77 = scmp.ne.s32.totalorder %s68, %s69
      %p78 = scmp.eq.s32.totalorder %s42, 0
      %p79 = por %p77, %p78
      %p80 = scmp.ne.s32.totalorder %s68, %s69
      %p81 = scmp.eq.s32.totalorder %s43, 2
      %p82 = por %p80, %p81
      %p84 = scmp.ne.s32.totalorder %s69, %s83
      %p85 = scmp.eq.s32.totalorder %s43, 0
      %p86 = por %p84, %p85
      %s88 = sadd.s32 %s87, 1
      %p91 = scmp.eq.s32.totalorder %s37, 2
      %p92 = scmp.ne.s32.totalorder %s87, %s89
      %p93 = scmp.eq.s32.totalorder %s37, 0
      %p94 = por %p92, %p93
      %p95 = scmp.ne.s32.totalorder %s87, %s89
      %p96 = scmp.eq.s32.totalorder %s42, 2
      %p97 = por %p95, %p96
      %p98 = scmp.ne.s32.totalorder %s89, %s90
      %p99 = scmp.eq.s32.totalorder %s42, 0
      %p100 = por %p98, %p99
      %p101 = scmp.ne.s32.totalorder %s89, %s90
      %p102 = scmp.eq.s32.totalorder %s43, 2
      %p103 = por %p101, %p102
      %p105 = scmp.ne.s32.totalorder %s90, %s104
      %p106 = scmp.eq.s32.totalorder %s43, 0
      %p107 = por %p105, %p106
      %s109 = sadd.s32 %s108, 1
      %p112 = scmp.eq.s32.totalorder %s37, 2
      %p113 = scmp.ne.s32.totalorder %s108, %s110
      %p114 = scmp.eq.s32.totalorder %s37, 0
      %p115 = por %p113, %p114
      %p116 = scmp.ne.s32.totalorder %s108, %s110
      %p117 = scmp.eq.s32.totalorder %s42, 2
      %p118 = por %p116, %p117
      %p119 = scmp.ne.s32.totalorder %s110, %s111
      %p120 = scmp.eq.s32.totalorder %s42, 0
      %p121 = por %p119, %p120
      %p122 = scmp.ne.s32.totalorder %s110, %s111
      %p123 = scmp.eq.s32.totalorder %s43, 2
      %p124 = por %p122, %p123
      %p126 = scmp.ne.s32.totalorder %s111, %s125
      %p127 = scmp.eq.s32.totalorder %s43, 0
      %p128 = por %p126, %p127
      %s130 = sadd.s32 %s129, 1
      %p133 = scmp.eq.s32.totalorder %s37, 2
      %p134 = scmp.ne.s32.totalorder %s129, %s131
      %p135 = scmp.eq.s32.totalorder %s37, 0
      %p136 = por %p134, %p135
      %p137 = scmp.ne.s32.totalorder %s129, %s131
      %p138 = scmp.eq.s32.totalorder %s42, 2
      %p139 = por %p137, %p138
      %p140 = scmp.ne.s32.totalorder %s131, %s132
      %p141 = scmp.eq.s32.totalorder %s42, 0
      %p142 = por %p140, %p141
      %p143 = scmp.ne.s32.totalorder %s131, %s132
      %p144 = scmp.eq.s32.totalorder %s43, 2
      %p145 = por %p143, %p144
      %p147 = scmp.ne.s32.totalorder %s132, %s146
      %p148 = scmp.eq.s32.totalorder %s43, 0
      %p149 = por %p147, %p148
      %s151 = sadd.s32 %s150, 1
      %p154 = scmp.eq.s32.totalorder %s37, 2
      %p155 = scmp.ne.s32.totalorder %s150, %s152
      %p156 = scmp.eq.s32.totalorder %s37, 0
      %p157 = por %p155, %p156
      %p158 = scmp.ne.s32.totalorder %s150, %s152
      %p159 = scmp.eq.s32.totalorder %s42, 2
      %p160 = por %p158, %p159
      %p161 = scmp.ne.s32.totalorder %s152, %s153
      %p162 = scmp.eq.s32.totalorder %s42, 0
      %p163 = por %p161, %p162
      %p164 = scmp.ne.s32.totalorder %s152, %s153
      %p165 = scmp.eq.s32.totalorder %s43, 2
      %p166 = por %p164, %p165
      %p168 = scmp.ne.s32.totalorder %s153, %s167
      %p169 = scmp.eq.s32.totalorder %s43, 0
      %p170 = por %p168, %p169
      %s172 = sadd.s32 %s171, 1
      %p175 = scmp.eq.s32.totalorder %s37, 2
      %p176 = scmp.ne.s32.totalorder %s171, %s173
      %p177 = scmp.eq.s32.totalorder %s37, 0
      %p178 = por %p176, %p177
      %p179 = scmp.ne.s32.totalorder %s171, %s173
      %p180 = scmp.eq.s32.totalorder %s42, 2
      %p181 = por %p179, %p180
      %p182 = scmp.ne.s32.totalorder %s173, %s174
      %p183 = scmp.eq.s32.totalorder %s42, 0
      %p184 = por %p182, %p183
      %p185 = scmp.ne.s32.totalorder %s173, %s174
      %p186 = scmp.eq.s32.totalorder %s43, 2
      %p187 = por %p185, %p186
      %p189 = scmp.ne.s32.totalorder %s174, %s188
      %p190 = scmp.eq.s32.totalorder %s43, 0
      %p191 = por %p189, %p190
      %s193 = sadd.s32 %s192, 1
      %p196 = scmp.eq.s32.totalorder %s37, 2
      %p197 = scmp.ne.s32.totalorder %s192, %s194
      %p198 = scmp.eq.s32.totalorder %s37, 0
      %p199 = por %p197, %p198
      %p200 = scmp.ne.s32.totalorder %s192, %s194
      %p201 = scmp.eq.s32.totalorder %s42, 2
      %p202 = por %p200, %p201
      %p203 = scmp.ne.s32.totalorder %s194, %s195
      %p204 = scmp.eq.s32.totalorder %s42, 0
      %p205 = por %p203, %p204
      %p206 = scmp.ne.s32.totalorder %s194, %s195
      %p207 = scmp.eq.s32.totalorder %s43, 2
      %p208 = por %p206, %p207
      %p210 = scmp.ne.s32.totalorder %s195, %s209
      %p211 = scmp.eq.s32.totalorder %s43, 0
      %p212 = por %p210, %p211
      %s214 = sadd.s32 %s213, 1
      %p217 = scmp.eq.s32.totalorder %s37, 2
      %p218 = scmp.ne.s32.totalorder %s213, %s215
      %p219 = scmp.eq.s32.totalorder %s37, 0
      %p220 = por %p218, %p219
      %p221 = scmp.ne.s32.totalorder %s213, %s215
      %p222 = scmp.eq.s32.totalorder %s42, 2
      %p223 = por %p221, %p222
      %p224 = scmp.ne.s32.totalorder %s215, %s216
      %p225 = scmp.eq.s32.totalorder %s42, 0
      %p226 = por %p224, %p225
      %p227 = scmp.ne.s32.totalorder %s215, %s216
      %p228 = scmp.eq.s32.totalorder %s43, 2
      %p229 = por %p227, %p228
      %p231 = scmp.ne.s32.totalorder %s216, %s230
      %p232 = scmp.eq.s32.totalorder %s43, 0
      %p233 = por %p231, %p232
      %s235 = sadd.s32 %s234, 1
      %p238 = scmp.eq.s32.totalorder %s37, 2
      %p239 = scmp.ne.s32.totalorder %s234, %s236
      %p240 = scmp.eq.s32.totalorder %s37, 0
      %p241 = por %p239, %p240
      %p242 = scmp.ne.s32.totalorder %s234, %s236
      %p243 = scmp.eq.s32.totalorder %s42, 2
      %p244 = por %p242, %p243
      %p245 = scmp.ne.s32.totalorder %s236, %s237
      %p246 = scmp.eq.s32.totalorder %s42, 0
      %p247 = por %p245, %p246
      %p248 = scmp.ne.s32.totalorder %s236, %s237
      %p249 = scmp.eq.s32.totalorder %s43, 2
      %p250 = por %p248, %p249
      %p252 = scmp.ne.s32.totalorder %s237, %s251
      %p253 = scmp.eq.s32.totalorder %s43, 0
      %p254 = por %p252, %p253
      %s256 = sadd.s32 %s255, 1
      %p259 = scmp.eq.s32.totalorder %s37, 2
      %p260 = scmp.ne.s32.totalorder %s255, %s257
      %p261 = scmp.eq.s32.totalorder %s37, 0
      %p262 = por %p260, %p261
      %p263 = scmp.ne.s32.totalorder %s255, %s257
      %p264 = scmp.eq.s32.totalorder %s42, 2
      %p265 = por %p263, %p264
      %p266 = scmp.ne.s32.totalorder %s257, %s258
      %p267 = scmp.eq.s32.totalorder %s42, 0
      %p268 = por %p266, %p267
      %p269 = scmp.ne.s32.totalorder %s257, %s258
      %p270 = scmp.eq.s32.totalorder %s43, 2
      %p271 = por %p269, %p270
      %p273 = scmp.ne.s32.totalorder %s258, %s272
      %p274 = scmp.eq.s32.totalorder %s43, 0
      %p275 = por %p273, %p274
      %s277 = sadd.s32 %s276, 1
      %p280 = scmp.eq.s32.totalorder %s37, 2
      %p281 = scmp.ne.s32.totalorder %s276, %s278
      %p282 = scmp.eq.s32.totalorder %s37, 0
      %p283 = por %p281, %p282
      %p284 = scmp.ne.s32.totalorder %s276, %s278
      %p285 = scmp.eq.s32.totalorder %s42, 2
      %p286 = por %p284, %p285
      %p287 = scmp.ne.s32.totalorder %s278, %s279
      %p288 = scmp.eq.s32.totalorder %s42, 0
      %p289 = por %p287, %p288
      %p290 = scmp.ne.s32.totalorder %s278, %s279
      %p291 = scmp.eq.s32.totalorder %s43, 2
      %p292 = por %p290, %p291
      %p294 = scmp.ne.s32.totalorder %s279, %s293
      %p295 = scmp.eq.s32.totalorder %s43, 0
      %p296 = por %p294, %p295
      %s298 = sadd.s32 %s297, 1
      %p301 = scmp.eq.s32.totalorder %s37, 2
      %p302 = scmp.ne.s32.totalorder %s297, %s299
      %p303 = scmp.eq.s32.totalorder %s37, 0
      %p304 = por %p302, %p303
      %p305 = scmp.ne.s32.totalorder %s297, %s299
      %p306 = scmp.eq.s32.totalorder %s42, 2
      %p307 = por %p305, %p306
      %p308 = scmp.ne.s32.totalorder %s299, %s300
      %p309 = scmp.eq.s32.totalorder %s42, 0
      %p310 = por %p308, %p309
      %p311 = scmp.ne.s32.totalorder %s299, %s300
      %p312 = scmp.eq.s32.totalorder %s43, 2
      %p313 = por %p311, %p312
      %p315 = scmp.ne.s32.totalorder %s300, %s314
      %p316 = scmp.eq.s32.totalorder %s43, 0
      %p317 = por %p315, %p316
      %s318 = ssub.s32 %s37, %s44
      %p319 = scmp.eq.s32.totalorder %s318, 0
      %s321 = sadd.s32 %s320, 1
      %s322 = scalar_select %p319, %s320, %s321
      %p325 = pneg %p319
      %p326 = scmp.eq.s32.totalorder %s37, 2
      %p327 = por %p325, %p326
      %p328 = scmp.ne.s32.totalorder %s320, %s323
      %p329 = scmp.eq.s32.totalorder %s37, 0
      %p330 = por %p328, %p329
      %p331 = scmp.ne.s32.totalorder %s320, %s323
      %p332 = scmp.eq.s32.totalorder %s42, 2
      %p333 = por %p331, %p332
      %p334 = scmp.ne.s32.totalorder %s323, %s324
      %p335 = scmp.eq.s32.totalorder %s42, 0
      %p336 = por %p334, %p335
      %p337 = scmp.ne.s32.totalorder %s323, %s324
      %p338 = scmp.eq.s32.totalorder %s43, 2
      %p339 = por %p337, %p338
      %p341 = scmp.ne.s32.totalorder %s324, %s340
      %p342 = scmp.eq.s32.totalorder %s43, 0
      %p343 = por %p341, %p342
      %p344 = scmp.le.s32.totalorder 1, %s37
      %p345 = scmp.lt.s32.totalorder %s37, 4
      %p346 = pnand %p344, %p345
      %p347 = pneg %p346
      // Predicated region
      $region9: #{triple_attention_highway.1} parent=5 // pred_check
        _
      $region10: #{triple_attention_highway.1} parent=5 // pred_check_branch
        %349 = sbr.rel (%p346) target = $region12
      $region11: #{triple_attention_highway.1} parent=5 // pred_region
        %s350 = ssub.s32 %s37, 1
        // Predicated region
        $region13: #{triple_attention_highway.1} parent=11 // pred_check
          %p351 = pneg %p58
        $region14: #{triple_attention_highway.1} parent=11 // pred_check_branch
          %353 = sbr.rel (%p351) target = $region16
        $region15: #{triple_attention_highway.1} parent=11 // pred_region
          _
        $region16: #{triple_attention_highway.1} parent=11 // pred_fallthru
          _
        // Predicated region
        $region17: #{triple_attention_highway.1} parent=11 // pred_check
          %p354 = pneg %p79
        $region18: #{triple_attention_highway.1} parent=11 // pred_check_branch
          %356 = sbr.rel (%p354) target = $region20
        $region19: #{triple_attention_highway.1} parent=11 // pred_region
          _
        $region20: #{triple_attention_highway.1} parent=11 // pred_fallthru
          _
        // Predicated region
        $region21: #{triple_attention_highway.1} parent=11 // pred_check
          %p357 = pneg %p100
        $region22: #{triple_attention_highway.1} parent=11 // pred_check_branch
          %359 = sbr.rel (%p357) target = $region24
        $region23: #{triple_attention_highway.1} parent=11 // pred_region
          _
        $region24: #{triple_attention_highway.1} parent=11 // pred_fallthru
          _
        // Predicated region
        $region25: #{triple_attention_highway.1} parent=11 // pred_check
          %p360 = pneg %p121
        $region26: #{triple_attention_highway.1} parent=11 // pred_check_branch
          %362 = sbr.rel (%p360) target = $region28
        $region27: #{triple_attention_highway.1} parent=11 // pred_region
          _
        $region28: #{triple_attention_highway.1} parent=11 // pred_fallthru
          _
        // Predicated region
        $region29: #{triple_attention_highway.1} parent=11 // pred_check
          %p363 = pneg %p142
        $region30: #{triple_attention_highway.1} parent=11 // pred_check_branch
          %365 = sbr.rel (%p363) target = $region32
        $region31: #{triple_attention_highway.1} parent=11 // pred_region
          _
        $region32: #{triple_attention_highway.1} parent=11 // pred_fallthru
          _
        // Predicated region
        $region33: #{triple_attention_highway.1} parent=11 // pred_check
          %p366 = pneg %p163
        $region34: #{triple_attention_highway.1} parent=11 // pred_check_branch
          %368 = sbr.rel (%p366) target = $region36
        $region35: #{triple_attention_highway.1} parent=11 // pred_region
          _
        $region36: #{triple_attention_highway.1} parent=11 // pred_fallthru
          _
        // Predicated region
        $region37: #{triple_attention_highway.1} parent=11 // pred_check
          %p369 = pneg %p184
        $region38: #{triple_attention_highway.1} parent=11 // pred_check_branch
          %371 = sbr.rel (%p369) target = $region40
        $region39: #{triple_attention_highway.1} parent=11 // pred_region
          _
        $region40: #{triple_attention_highway.1} parent=11 // pred_fallthru
          _
        // Predicated region
        $region41: #{triple_attention_highway.1} parent=11 // pred_check
          %p372 = pneg %p205
        $region42: #{triple_attention_highway.1} parent=11 // pred_check_branch
          %374 = sbr.rel (%p372) target = $region44
        $region43: #{triple_attention_highway.1} parent=11 // pred_region
          %s376 = ssub.s32 2048, 2048
          %377 = vsyncadd [#allocation7], %s376
          %s378 = sshll.u32 [#allocation6], 4
          %s379 = int_to_ptr.vmem [resolvable:$true] %s378
          %384 = dma.hbm_to_vmem [thread:$0]  %s10, 2048, %s379, [#allocation7], 128, 128, 8
        $region44: #{triple_attention_highway.1} parent=11 // pred_fallthru
          _
        // Predicated region
        $region45: #{triple_attention_highway.1} parent=11 // pred_check
          %p385 = pneg %p226
        $region46: #{triple_attention_highway.1} parent=11 // pred_check_branch
          %387 = sbr.rel (%p385) target = $region48
        $region47: #{triple_attention_highway.1} parent=11 // pred_region
          _
        $region48: #{triple_attention_highway.1} parent=11 // pred_fallthru
          _
        // Predicated region
        $region49: #{triple_attention_highway.1} parent=11 // pred_check
          %p388 = pneg %p247
        $region50: #{triple_attention_highway.1} parent=11 // pred_check_branch
          %390 = sbr.rel (%p388) target = $region52
        $region51: #{triple_attention_highway.1} parent=11 // pred_region
          _
        $region52: #{triple_attention_highway.1} parent=11 // pred_fallthru
          _
        // Predicated region
        $region53: #{triple_attention_highway.1} parent=11 // pred_check
          %p391 = pneg %p268
        $region54: #{triple_attention_highway.1} parent=11 // pred_check_branch
          %393 = sbr.rel (%p391) target = $region56
        $region55: #{triple_attention_highway.1} parent=11 // pred_region
          _
        $region56: #{triple_attention_highway.1} parent=11 // pred_fallthru
          _
        // Predicated region
        $region57: #{triple_attention_highway.1} parent=11 // pred_check
          %p394 = pneg %p289
        $region58: #{triple_attention_highway.1} parent=11 // pred_check_branch
          %396 = sbr.rel (%p394) target = $region60
        $region59: #{triple_attention_highway.1} parent=11 // pred_region
          _
        $region60: #{triple_attention_highway.1} parent=11 // pred_fallthru
          _
        // Predicated region
        $region61: #{triple_attention_highway.1} parent=11 // pred_check
          %p397 = pneg %p310
        $region62: #{triple_attention_highway.1} parent=11 // pred_check_branch
          %399 = sbr.rel (%p397) target = $region64
        $region63: #{triple_attention_highway.1} parent=11 // pred_region
          _
        $region64: #{triple_attention_highway.1} parent=11 // pred_fallthru
          _
      $region12: #{triple_attention_highway.1} parent=5 // pred_fallthru
        _
      %p400 = scmp.lt.s32.totalorder %s37, 3
      // Predicated region
      $region65: #{triple_attention_highway.1} parent=5 // pred_check
        %p401 = pneg %p400
      $region66: #{triple_attention_highway.1} parent=5 // pred_check_branch
        %403 = sbr.rel (%p401) target = $region68
      $region67: #{triple_attention_highway.1} parent=5 // pred_region
        _
      $region68: #{triple_attention_highway.1} parent=5 // pred_fallthru
        _
      %p404 = scmp.le.s32.totalorder 1, %s37
      %p405 = scmp.lt.s32.totalorder %s37, 4
      %p406 = pnand %p404, %p405
      %p407 = pneg %p406
      // Predicated region
      $region69: #{triple_attention_highway.1} parent=5 // pred_check
        _
      $region70: #{triple_attention_highway.1} parent=5 // pred_check_branch
        %409 = sbr.rel (%p406) target = $region72
      $region71: #{triple_attention_highway.1} parent=5 // pred_region
        %s410 = ssub.s32 %s37, 1
        // Predicated region
        $region73: #{triple_attention_highway.1} parent=71 // pred_check
          %p411 = pneg %p205
        $region74: #{triple_attention_highway.1} parent=71 // pred_check_branch
          %413 = sbr.rel (%p411) target = $region76
        $region75: #{triple_attention_highway.1} parent=71 // pred_region
          %414 = dma.done [#allocation7], 2048
        $region76: #{triple_attention_highway.1} parent=71 // pred_fallthru
          _
        %p415 = pneg %p58
        %p416 = pneg %p55
        %p417 = pneg %p79
        %p418 = pneg %p76
        %p419 = pneg %p100
        %p420 = pneg %p97
        %p421 = pneg %p121
        %p422 = pneg %p118
        %p423 = pneg %p142
        %p424 = pneg %p139
        %p425 = pneg %p163
        %p426 = pneg %p160
        %p427 = pneg %p184
        %p428 = pneg %p181
        %p429 = pneg %p205
        %p430 = pneg %p202
        %p431 = pneg %p226
        %p432 = pneg %p223
        %p433 = pneg %p247
        %p434 = pneg %p244
        %p435 = pneg %p268
        %p436 = pneg %p265
        %p437 = pneg %p289
        %p438 = pneg %p286
        %p439 = pneg %p310
        %p440 = pneg %p307
        %p441 = pneg %p336
        %p442 = pneg %p333
        %p443 = scmp.lt.s32.totalorder %s42, 2
        %s444 = scalar_select %p443, %s42, 2
        %s445 = smul.addr %s444, 2
        %s446 = smul.addr %s445, 8
        %s447 = scalar_lea.vmem %s16, %s446
        %p448 = scmp.lt.s32.totalorder %s42, 2
        %s449 = scalar_select %p448, %s42, 2
        %s450 = smul.addr %s449, 2
        %s451 = smul.addr %s450, 8
        %s452 = scalar_lea.vmem %s16, %s451
        %s454 = smul.u32 %s42, 16
        %s455 = scalar_lea.vmem %s3, %s454
        %v456 = vld [vmem:[%s455] sm:$0xff]
        %v457 = vld [vmem:[%s455 + $0x8] sm:$0xff]
        %s458 = sld [smem:[#allocation3 + %s42]]
        %s459 = smul.u32 %s458, 16
        %s460 = scalar_lea.vmem %s3, %s459
        %v461 = vld [vmem:[%s460] sm:$0xff]
        %v462 = vld [vmem:[%s460 + $0x8] sm:$0xff]
        %s463 = sld [smem:[#allocation4 + %s42]]
        %s464 = smul.u32 %s463, 16
        %s465 = scalar_lea.vmem %s3, %s464
        %v466 = vld [vmem:[%s465] sm:$0xff]
        %v467 = vld [vmem:[%s465 + $0x8] sm:$0xff]
        %s468 = sld [smem:[#allocation5 + %s42]]
        %s469 = smul.u32 %s468, 16
        %s470 = scalar_lea.vmem %s3, %s469
        %v471 = vld [vmem:[%s470] sm:$0xff]
        %v472 = vld [vmem:[%s470 + $0x8] sm:$0xff]
        %v473 = vmul.f32 %v456, 0.17677669
        %v474 = vmul.f32 %v457, 0.17677669
        %v475 = vpack.c.bf16 %v473, %v473
        %v476 = vpack.c.bf16 %v474, %v474
        %v477 = vmul.f32 %v466, 0.17677669
        %v478 = vmul.f32 %v467, 0.17677669
        %v479 = vpack.c.bf16 %v477, %v477
        %v480 = vpack.c.bf16 %v478, %v478
        %v481 = vpack.c.bf16 %v461, %v461
        %v482 = vpack.c.bf16 %v462, %v462
        %vm483 = vcmask 261120
        %v485 = vsel %vm483, %v475, 0
        %v488 = vsel %vm483, %v481, 0
        %490 = vmatprep.subr.bf16.mxu0 0
        %491 = vmatpush1.bf16.xpose.msra.mxu0 %v488
        %492 = vmatprep.subr.bf16.mxu0 0
        %493 = vmatpush1.bf16.xpose.msra.mxu0 0
        %494 = vmatprep.subr.bf16.mxu0 0
        %495 = vmatpush1.bf16.xpose.msra.mxu0 0
        %496 = vmatprep.subr.bf16.mxu0 0
        %497 = vmatpush1.bf16.xpose.msra.mxu0 0
        %498 = vmatprep.subr.bf16.mxu0 0
        %499 = vmatpush1.bf16.xpose.msra.mxu0 0
        %500 = vmatprep.subr.bf16.mxu0 0
        %501 = vmatpush1.bf16.xpose.msra.mxu0 0
        %502 = vmatprep.subr.bf16.mxu0 0
        %503 = vmatpush1.bf16.xpose.msra.mxu0 0
        %504 = vmatprep.subr.bf16.mxu0 0
        %505 = vmatpush1.bf16.xpose.msra.mxu0 0
        %506 = vmatprep.subr.bf16.mxu0 0
        %507 = vmatpush1.bf16.xpose.msra.mxu0 0
        %508 = vmatprep.subr.bf16.mxu0 0
        %509 = vmatpush1.bf16.xpose.msra.mxu0 0
        %510 = vmatprep.subr.bf16.mxu0 0
        %511 = vmatpush1.bf16.xpose.msra.mxu0 0
        %512 = vmatprep.subr.bf16.mxu0 0
        %513 = vmatpush1.bf16.xpose.msra.mxu0 0
        %514 = vmatprep.subr.bf16.mxu0 0
        %515 = vmatpush1.bf16.xpose.msra.mxu0 0
        %516 = vmatprep.subr.bf16.mxu0 0
        %517 = vmatpush1.bf16.xpose.msra.mxu0 0
        %518 = vmatprep.subr.bf16.mxu0 0
        %519 = vmatpush1.bf16.xpose.msra.mxu0 0
        %520 = vmatprep.subr.bf16.mxu0 0
        %521 = vmatpush1.bf16.xpose.msra.mxu0 0
        %522 = vmatprep.mubr.bf16.mxu0 0
        %523 = vmatmul.mubr.bf16.gmra.mrb[0].mxu0 %v485
        %v524 = vpop.f32.mrb[0].mxu0
        %v525 = vadd.f32 0.0, %v524
        %v526 = vpop.f32.mrb[0].mxu0
        %v527 = vpop.f32.mrb[0].mxu0
        %v528 = vpop.f32.mrb[0].mxu0
        %529 = vdwg.mxu0
        %v531 = vsel %vm483, %v476, 0
        %v534 = vsel %vm483, %v482, 0
        %536 = vmatprep.subr.bf16.mxu0 0
        %537 = vmatpush1.bf16.xpose.msra.mxu0 %v534
        %538 = vmatprep.subr.bf16.mxu0 0
        %539 = vmatpush1.bf16.xpose.msra.mxu0 0
        %540 = vmatprep.subr.bf16.mxu0 0
        %541 = vmatpush1.bf16.xpose.msra.mxu0 0
        %542 = vmatprep.subr.bf16.mxu0 0
        %543 = vmatpush1.bf16.xpose.msra.mxu0 0
        %544 = vmatprep.subr.bf16.mxu0 0
        %545 = vmatpush1.bf16.xpose.msra.mxu0 0
        %546 = vmatprep.subr.bf16.mxu0 0
        %547 = vmatpush1.bf16.xpose.msra.mxu0 0
        %548 = vmatprep.subr.bf16.mxu0 0
        %549 = vmatpush1.bf16.xpose.msra.mxu0 0
        %550 = vmatprep.subr.bf16.mxu0 0
        %551 = vmatpush1.bf16.xpose.msra.mxu0 0
        %552 = vmatprep.subr.bf16.mxu0 0
        %553 = vmatpush1.bf16.xpose.msra.mxu0 0
        %554 = vmatprep.subr.bf16.mxu0 0
        %555 = vmatpush1.bf16.xpose.msra.mxu0 0
        %556 = vmatprep.subr.bf16.mxu0 0
        %557 = vmatpush1.bf16.xpose.msra.mxu0 0
        %558 = vmatprep.subr.bf16.mxu0 0
        %559 = vmatpush1.bf16.xpose.msra.mxu0 0
        %560 = vmatprep.subr.bf16.mxu0 0
        %561 = vmatpush1.bf16.xpose.msra.mxu0 0
        %562 = vmatprep.subr.bf16.mxu0 0
        %563 = vmatpush1.bf16.xpose.msra.mxu0 0
        %564 = vmatprep.subr.bf16.mxu0 0
        %565 = vmatpush1.bf16.xpose.msra.mxu0 0
        %566 = vmatprep.subr.bf16.mxu0 0
        %567 = vmatpush1.bf16.xpose.msra.mxu0 0
        %568 = vmatprep.mubr.bf16.mxu0 0
        %569 = vmatmul.mubr.bf16.gmra.mrb[0].mxu0 %v531
        %v570 = vpop.f32.mrb[0].mxu0
        %v571 = vadd.f32 0.0, %v570
        %v572 = vpop.f32.mrb[0].mxu0
        %v573 = vpop.f32.mrb[0].mxu0
        %v574 = vpop.f32.mrb[0].mxu0
        %575 = vdwg.mxu0
        %vm576 = vcmask 64512
        %v577 = vsel %vm576, %v525, -inf
        %578 = vmax.xlane.f32.xlu0 %v577
        %v579 = vpop.xlane.xlu0 %578
        %v580 = vsel %vm576, %v571, -inf
        %581 = vmax.xlane.f32.xlu0 %v580
        %v582 = vpop.xlane.xlu0 %581
        %v583 = vsub.f32 %v525, %v579
        %v584 = vsub.f32 %v571, %v582
        %v585 = vmul.f32 %v583, 1.442695
        %v586 = vpow.pop %v585
        %v587 = vmul.f32 %v584, 1.442695
        %v588 = vpow.pop %v587
        %v589 = vsel %vm576, %v586, 0.0
        %590 = vadd.xlane.f32.xlu0 %v589
        %v591 = vpop.xlane.xlu0 %590
        %v592 = vsel %vm576, %v588, 0.0
        %593 = vadd.xlane.f32.xlu0 %v592
        %v594 = vpop.xlane.xlu0 %593
        %v595 = vpack.c.bf16 %v586, %v586
        %v596 = vpack.c.bf16 %v588, %v588
        %v598 = vsel %vm576, %v595, 0
        %vm600 = vcmask 1043456
        %v601 = vsel %vm600, %v481, 0
        %603 = vmatprep.subr.bf16.mxu0 0
        %604 = vmatpush1.bf16.msra.mxu0 %v601
        %605 = vmatprep.subr.bf16.mxu0 0
        %606 = vmatpush1.bf16.msra.mxu0 0
        %607 = vmatprep.subr.bf16.mxu0 0
        %608 = vmatpush1.bf16.msra.mxu0 0
        %609 = vmatprep.subr.bf16.mxu0 0
        %610 = vmatpush1.bf16.msra.mxu0 0
        %611 = vmatprep.subr.bf16.mxu0 0
        %612 = vmatpush1.bf16.msra.mxu0 0
        %613 = vmatprep.subr.bf16.mxu0 0
        %614 = vmatpush1.bf16.msra.mxu0 0
        %615 = vmatprep.subr.bf16.mxu0 0
        %616 = vmatpush1.bf16.msra.mxu0 0
        %617 = vmatprep.subr.bf16.mxu0 0
        %618 = vmatpush1.bf16.msra.mxu0 0
        %619 = vmatprep.subr.bf16.mxu0 0
        %620 = vmatpush1.bf16.msra.mxu0 0
        %621 = vmatprep.subr.bf16.mxu0 0
        %622 = vmatpush1.bf16.msra.mxu0 0
        %623 = vmatprep.subr.bf16.mxu0 0
        %624 = vmatpush1.bf16.msra.mxu0 0
        %625 = vmatprep.subr.bf16.mxu0 0
        %626 = vmatpush1.bf16.msra.mxu0 0
        %627 = vmatprep.subr.bf16.mxu0 0
        %628 = vmatpush1.bf16.msra.mxu0 0
        %629 = vmatprep.subr.bf16.mxu0 0
        %630 = vmatpush1.bf16.msra.mxu0 0
        %631 = vmatprep.subr.bf16.mxu0 0
        %632 = vmatpush1.bf16.msra.mxu0 0
        %633 = vmatprep.subr.bf16.mxu0 0
        %634 = vmatpush1.bf16.msra.mxu0 0
        %635 = vmatprep.mubr.bf16.mxu0 0
        %636 = vmatmul.mubr.bf16.gmra.mrb[0].mxu0 %v598
        %v637 = vpop.f32.mrb[0].mxu0
        %v638 = vadd.f32 0.0, %v637
        %v639 = vpop.f32.mrb[0].mxu0
        %v640 = vpop.f32.mrb[0].mxu0
        %v641 = vpop.f32.mrb[0].mxu0
        %642 = vdwg.mxu0
        %v644 = vsel %vm576, %v596, 0
        %v646 = vsel %vm600, %v482, 0
        %648 = vmatprep.subr.bf16.mxu0 0
        %649 = vmatpush1.bf16.msra.mxu0 %v646
        %650 = vmatprep.subr.bf16.mxu0 0
        %651 = vmatpush1.bf16.msra.mxu0 0
        %652 = vmatprep.subr.bf16.mxu0 0
        %653 = vmatpush1.bf16.msra.mxu0 0
        %654 = vmatprep.subr.bf16.mxu0 0
        %655 = vmatpush1.bf16.msra.mxu0 0
        %656 = vmatprep.subr.bf16.mxu0 0
        %657 = vmatpush1.bf16.msra.mxu0 0
        %658 = vmatprep.subr.bf16.mxu0 0
        %659 = vmatpush1.bf16.msra.mxu0 0
        %660 = vmatprep.subr.bf16.mxu0 0
        %661 = vmatpush1.bf16.msra.mxu0 0
        %662 = vmatprep.subr.bf16.mxu0 0
        %663 = vmatpush1.bf16.msra.mxu0 0
        %664 = vmatprep.subr.bf16.mxu0 0
        %665 = vmatpush1.bf16.msra.mxu0 0
        %666 = vmatprep.subr.bf16.mxu0 0
        %667 = vmatpush1.bf16.msra.mxu0 0
        %668 = vmatprep.subr.bf16.mxu0 0
        %669 = vmatpush1.bf16.msra.mxu0 0
        %670 = vmatprep.subr.bf16.mxu0 0
        %671 = vmatpush1.bf16.msra.mxu0 0
        %672 = vmatprep.subr.bf16.mxu0 0
        %673 = vmatpush1.bf16.msra.mxu0 0
        %674 = vmatprep.subr.bf16.mxu0 0
        %675 = vmatpush1.bf16.msra.mxu0 0
        %676 = vmatprep.subr.bf16.mxu0 0
        %677 = vmatpush1.bf16.msra.mxu0 0
        %678 = vmatprep.subr.bf16.mxu0 0
        %679 = vmatpush1.bf16.msra.mxu0 0
        %680 = vmatprep.mubr.bf16.mxu0 0
        %681 = vmatmul.mubr.bf16.gmra.mrb[0].mxu0 %v644
        %v682 = vpop.f32.mrb[0].mxu0
        %v683 = vadd.f32 0.0, %v682
        %v684 = vpop.f32.mrb[0].mxu0
        %v685 = vpop.f32.mrb[0].mxu0
        %v686 = vpop.f32.mrb[0].mxu0
        %687 = vdwg.mxu0
        %v688 = vrcp.pop %v591
        %v689 = vrcp.pop %v594
        %v690 = vmul.f32 %v638, %v688
        %v691 = vmul.f32 %v683, %v689
        %v692 = vpack.c.bf16 %v471, %v471
        %v693 = vpack.c.bf16 %v472, %v472
        %v695 = vsel %vm483, %v479, 0
        %v698 = vsel %vm483, %v692, 0
        %700 = vmatprep.subr.bf16.mxu0 0
        %701 = vmatpush1.bf16.xpose.msra.mxu0 %v698
        %702 = vmatprep.subr.bf16.mxu0 0
        %703 = vmatpush1.bf16.xpose.msra.mxu0 0
        %704 = vmatprep.subr.bf16.mxu0 0
        %705 = vmatpush1.bf16.xpose.msra.mxu0 0
        %706 = vmatprep.subr.bf16.mxu0 0
        %707 = vmatpush1.bf16.xpose.msra.mxu0 0
        %708 = vmatprep.subr.bf16.mxu0 0
        %709 = vmatpush1.bf16.xpose.msra.mxu0 0
        %710 = vmatprep.subr.bf16.mxu0 0
        %711 = vmatpush1.bf16.xpose.msra.mxu0 0
        %712 = vmatprep.subr.bf16.mxu0 0
        %713 = vmatpush1.bf16.xpose.msra.mxu0 0
        %714 = vmatprep.subr.bf16.mxu0 0
        %715 = vmatpush1.bf16.xpose.msra.mxu0 0
        %716 = vmatprep.subr.bf16.mxu0 0
        %717 = vmatpush1.bf16.xpose.msra.mxu0 0
        %718 = vmatprep.subr.bf16.mxu0 0
        %719 = vmatpush1.bf16.xpose.msra.mxu0 0
        %720 = vmatprep.subr.bf16.mxu0 0
        %721 = vmatpush1.bf16.xpose.msra.mxu0 0
        %722 = vmatprep.subr.bf16.mxu0 0
        %723 = vmatpush1.bf16.xpose.msra.mxu0 0
        %724 = vmatprep.subr.bf16.mxu0 0
        %725 = vmatpush1.bf16.xpose.msra.mxu0 0
        %726 = vmatprep.subr.bf16.mxu0 0
        %727 = vmatpush1.bf16.xpose.msra.mxu0 0
        %728 = vmatprep.subr.bf16.mxu0 0
        %729 = vmatpush1.bf16.xpose.msra.mxu0 0
        %730 = vmatprep.subr.bf16.mxu0 0
        %731 = vmatpush1.bf16.xpose.msra.mxu0 0
        %732 = vmatprep.mubr.bf16.mxu0 0
        %733 = vmatmul.mubr.bf16.gmra.mrb[0].mxu0 %v695
        %v734 = vpop.f32.mrb[0].mxu0
        %v735 = vadd.f32 0.0, %v734
        %v736 = vpop.f32.mrb[0].mxu0
        %v737 = vpop.f32.mrb[0].mxu0
        %v738 = vpop.f32.mrb[0].mxu0
        %739 = vdwg.mxu0
        %v741 = vsel %vm483, %v480, 0
        %v744 = vsel %vm483, %v693, 0
        %746 = vmatprep.subr.bf16.mxu0 0
        %747 = vmatpush1.bf16.xpose.msra.mxu0 %v744
        %748 = vmatprep.subr.bf16.mxu0 0
        %749 = vmatpush1.bf16.xpose.msra.mxu0 0
        %750 = vmatprep.subr.bf16.mxu0 0
        %751 = vmatpush1.bf16.xpose.msra.mxu0 0
        %752 = vmatprep.subr.bf16.mxu0 0
        %753 = vmatpush1.bf16.xpose.msra.mxu0 0
        %754 = vmatprep.subr.bf16.mxu0 0
        %755 = vmatpush1.bf16.xpose.msra.mxu0 0
        %756 = vmatprep.subr.bf16.mxu0 0
        %757 = vmatpush1.bf16.xpose.msra.mxu0 0
        %758 = vmatprep.subr.bf16.mxu0 0
        %759 = vmatpush1.bf16.xpose.msra.mxu0 0
        %760 = vmatprep.subr.bf16.mxu0 0
        %761 = vmatpush1.bf16.xpose.msra.mxu0 0
        %762 = vmatprep.subr.bf16.mxu0 0
        %763 = vmatpush1.bf16.xpose.msra.mxu0 0
        %764 = vmatprep.subr.bf16.mxu0 0
        %765 = vmatpush1.bf16.xpose.msra.mxu0 0
        %766 = vmatprep.subr.bf16.mxu0 0
        %767 = vmatpush1.bf16.xpose.msra.mxu0 0
        %768 = vmatprep.subr.bf16.mxu0 0
        %769 = vmatpush1.bf16.xpose.msra.mxu0 0
        %770 = vmatprep.subr.bf16.mxu0 0
        %771 = vmatpush1.bf16.xpose.msra.mxu0 0
        %772 = vmatprep.subr.bf16.mxu0 0
        %773 = vmatpush1.bf16.xpose.msra.mxu0 0
        %774 = vmatprep.subr.bf16.mxu0 0
        %775 = vmatpush1.bf16.xpose.msra.mxu0 0
        %776 = vmatprep.subr.bf16.mxu0 0
        %777 = vmatpush1.bf16.xpose.msra.mxu0 0
        %778 = vmatprep.mubr.bf16.mxu0 0
        %779 = vmatmul.mubr.bf16.gmra.mrb[0].mxu0 %v741
        %v780 = vpop.f32.mrb[0].mxu0
        %v781 = vadd.f32 0.0, %v780
        %v782 = vpop.f32.mrb[0].mxu0
        %v783 = vpop.f32.mrb[0].mxu0
        %v784 = vpop.f32.mrb[0].mxu0
        %785 = vdwg.mxu0
        %v786 = vsel %vm576, %v735, -inf
        %787 = vmax.xlane.f32.xlu0 %v786
        %v788 = vpop.xlane.xlu0 %787
        %v789 = vsel %vm576, %v781, -inf
        %790 = vmax.xlane.f32.xlu0 %v789
        %v791 = vpop.xlane.xlu0 %790
        %v792 = vsub.f32 %v735, %v788
        %v793 = vsub.f32 %v781, %v791
        %v794 = vmul.f32 %v792, 1.442695
        %v795 = vpow.pop %v794
        %v796 = vmul.f32 %v793, 1.442695
        %v797 = vpow.pop %v796
        %v798 = vsel %vm576, %v795, 0.0
        %799 = vadd.xlane.f32.xlu0 %v798
        %v800 = vpop.xlane.xlu0 %799
        %v801 = vsel %vm576, %v797, 0.0
        %802 = vadd.xlane.f32.xlu0 %v801
        %v803 = vpop.xlane.xlu0 %802
        %v804 = vpack.c.bf16 %v795, %v795
        %v805 = vpack.c.bf16 %v797, %v797
        %v807 = vsel %vm576, %v804, 0
        %v809 = vsel %vm600, %v692, 0
        %811 = vmatprep.subr.bf16.mxu0 0
        %812 = vmatpush1.bf16.msra.mxu0 %v809
        %813 = vmatprep.subr.bf16.mxu0 0
        %814 = vmatpush1.bf16.msra.mxu0 0
        %815 = vmatprep.subr.bf16.mxu0 0
        %816 = vmatpush1.bf16.msra.mxu0 0
        %817 = vmatprep.subr.bf16.mxu0 0
        %818 = vmatpush1.bf16.msra.mxu0 0
        %819 = vmatprep.subr.bf16.mxu0 0
        %820 = vmatpush1.bf16.msra.mxu0 0
        %821 = vmatprep.subr.bf16.mxu0 0
        %822 = vmatpush1.bf16.msra.mxu0 0
        %823 = vmatprep.subr.bf16.mxu0 0
        %824 = vmatpush1.bf16.msra.mxu0 0
        %825 = vmatprep.subr.bf16.mxu0 0
        %826 = vmatpush1.bf16.msra.mxu0 0
        %827 = vmatprep.subr.bf16.mxu0 0
        %828 = vmatpush1.bf16.msra.mxu0 0
        %829 = vmatprep.subr.bf16.mxu0 0
        %830 = vmatpush1.bf16.msra.mxu0 0
        %831 = vmatprep.subr.bf16.mxu0 0
        %832 = vmatpush1.bf16.msra.mxu0 0
        %833 = vmatprep.subr.bf16.mxu0 0
        %834 = vmatpush1.bf16.msra.mxu0 0
        %835 = vmatprep.subr.bf16.mxu0 0
        %836 = vmatpush1.bf16.msra.mxu0 0
        %837 = vmatprep.subr.bf16.mxu0 0
        %838 = vmatpush1.bf16.msra.mxu0 0
        %839 = vmatprep.subr.bf16.mxu0 0
        %840 = vmatpush1.bf16.msra.mxu0 0
        %841 = vmatprep.subr.bf16.mxu0 0
        %842 = vmatpush1.bf16.msra.mxu0 0
        %843 = vmatprep.mubr.bf16.mxu0 0
        %844 = vmatmul.mubr.bf16.gmra.mrb[0].mxu0 %v807
        %v845 = vpop.f32.mrb[0].mxu0
        %v846 = vadd.f32 0.0, %v845
        %v847 = vpop.f32.mrb[0].mxu0
        %v848 = vpop.f32.mrb[0].mxu0
        %v849 = vpop.f32.mrb[0].mxu0
        %850 = vdwg.mxu0
        %v852 = vsel %vm576, %v805, 0
        %v854 = vsel %vm600, %v693, 0
        %856 = vmatprep.subr.bf16.mxu0 0
        %857 = vmatpush1.bf16.msra.mxu0 %v854
        %858 = vmatprep.subr.bf16.mxu0 0
        %859 = vmatpush1.bf16.msra.mxu0 0
        %860 = vmatprep.subr.bf16.mxu0 0
        %861 = vmatpush1.bf16.msra.mxu0 0
        %862 = vmatprep.subr.bf16.mxu0 0
        %863 = vmatpush1.bf16.msra.mxu0 0
        %864 = vmatprep.subr.bf16.mxu0 0
        %865 = vmatpush1.bf16.msra.mxu0 0
        %866 = vmatprep.subr.bf16.mxu0 0
        %867 = vmatpush1.bf16.msra.mxu0 0
        %868 = vmatprep.subr.bf16.mxu0 0
        %869 = vmatpush1.bf16.msra.mxu0 0
        %870 = vmatprep.subr.bf16.mxu0 0
        %871 = vmatpush1.bf16.msra.mxu0 0
        %872 = vmatprep.subr.bf16.mxu0 0
        %873 = vmatpush1.bf16.msra.mxu0 0
        %874 = vmatprep.subr.bf16.mxu0 0
        %875 = vmatpush1.bf16.msra.mxu0 0
        %876 = vmatprep.subr.bf16.mxu0 0
        %877 = vmatpush1.bf16.msra.mxu0 0
        %878 = vmatprep.subr.bf16.mxu0 0
        %879 = vmatpush1.bf16.msra.mxu0 0
        %880 = vmatprep.subr.bf16.mxu0 0
        %881 = vmatpush1.bf16.msra.mxu0 0
        %882 = vmatprep.subr.bf16.mxu0 0
        %883 = vmatpush1.bf16.msra.mxu0 0
        %884 = vmatprep.subr.bf16.mxu0 0
        %885 = vmatpush1.bf16.msra.mxu0 0
        %886 = vmatprep.subr.bf16.mxu0 0
        %887 = vmatpush1.bf16.msra.mxu0 0
        %888 = vmatprep.mubr.bf16.mxu0 0
        %889 = vmatmul.mubr.bf16.gmra.mrb[0].mxu0 %v852
        %v890 = vpop.f32.mrb[0].mxu0
        %v891 = vadd.f32 0.0, %v890
        %v892 = vpop.f32.mrb[0].mxu0
        %v893 = vpop.f32.mrb[0].mxu0
        %v894 = vpop.f32.mrb[0].mxu0
        %895 = vdwg.mxu0
        %v896 = vrcp.pop %v800
        %v897 = vrcp.pop %v803
        %v898 = vmul.f32 %v846, %v896
        %v899 = vmul.f32 %v891, %v897
        %v900 = vpack.c.bf16 %v456, %v456
        %v901 = vpack.c.bf16 %v457, %v457
        %v903 = vsel %vm483, %v900, 0
        %905 = vmatprep.subr.bf16.mxu0 0
        %906 = vmatpush1.bf16.xpose.msra.mxu0 %v903
        %907 = vmatprep.subr.bf16.mxu0 0
        %908 = vmatpush1.bf16.xpose.msra.mxu0 0
        %909 = vmatprep.subr.bf16.mxu0 0
        %910 = vmatpush1.bf16.xpose.msra.mxu0 0
        %911 = vmatprep.subr.bf16.mxu0 0
        %912 = vmatpush1.bf16.xpose.msra.mxu0 0
        %913 = vmatprep.subr.bf16.mxu0 0
        %914 = vmatpush1.bf16.xpose.msra.mxu0 0
        %915 = vmatprep.subr.bf16.mxu0 0
        %916 = vmatpush1.bf16.xpose.msra.mxu0 0
        %917 = vmatprep.subr.bf16.mxu0 0
        %918 = vmatpush1.bf16.xpose.msra.mxu0 0
        %919 = vmatprep.subr.bf16.mxu0 0
        %920 = vmatpush1.bf16.xpose.msra.mxu0 0
        %921 = vmatprep.subr.bf16.mxu0 0
        %922 = vmatpush1.bf16.xpose.msra.mxu0 0
        %923 = vmatprep.subr.bf16.mxu0 0
        %924 = vmatpush1.bf16.xpose.msra.mxu0 0
        %925 = vmatprep.subr.bf16.mxu0 0
        %926 = vmatpush1.bf16.xpose.msra.mxu0 0
        %927 = vmatprep.subr.bf16.mxu0 0
        %928 = vmatpush1.bf16.xpose.msra.mxu0 0
        %929 = vmatprep.subr.bf16.mxu0 0
        %930 = vmatpush1.bf16.xpose.msra.mxu0 0
        %931 = vmatprep.subr.bf16.mxu0 0
        %932 = vmatpush1.bf16.xpose.msra.mxu0 0
        %933 = vmatprep.subr.bf16.mxu0 0
        %934 = vmatpush1.bf16.xpose.msra.mxu0 0
        %935 = vmatprep.subr.bf16.mxu0 0
        %936 = vmatpush1.bf16.xpose.msra.mxu0 0
        %937 = vmatprep.mubr.bf16.mxu0 0
        %938 = vmatmul.mubr.bf16.gmra.mrb[0].mxu0 %v485
        %v939 = vpop.f32.mrb[0].mxu0
        %v940 = vadd.f32 0.0, %v939
        %v941 = vpop.f32.mrb[0].mxu0
        %v942 = vpop.f32.mrb[0].mxu0
        %v943 = vpop.f32.mrb[0].mxu0
        %944 = vdwg.mxu0
        %v946 = vsel %vm483, %v901, 0
        %948 = vmatprep.subr.bf16.mxu0 0
        %949 = vmatpush1.bf16.xpose.msra.mxu0 %v946
        %950 = vmatprep.subr.bf16.mxu0 0
        %951 = vmatpush1.bf16.xpose.msra.mxu0 0
        %952 = vmatprep.subr.bf16.mxu0 0
        %953 = vmatpush1.bf16.xpose.msra.mxu0 0
        %954 = vmatprep.subr.bf16.mxu0 0
        %955 = vmatpush1.bf16.xpose.msra.mxu0 0
        %956 = vmatprep.subr.bf16.mxu0 0
        %957 = vmatpush1.bf16.xpose.msra.mxu0 0
        %958 = vmatprep.subr.bf16.mxu0 0
        %959 = vmatpush1.bf16.xpose.msra.mxu0 0
        %960 = vmatprep.subr.bf16.mxu0 0
        %961 = vmatpush1.bf16.xpose.msra.mxu0 0
        %962 = vmatprep.subr.bf16.mxu0 0
        %963 = vmatpush1.bf16.xpose.msra.mxu0 0
        %964 = vmatprep.subr.bf16.mxu0 0
        %965 = vmatpush1.bf16.xpose.msra.mxu0 0
        %966 = vmatprep.subr.bf16.mxu0 0
        %967 = vmatpush1.bf16.xpose.msra.mxu0 0
        %968 = vmatprep.subr.bf16.mxu0 0
        %969 = vmatpush1.bf16.xpose.msra.mxu0 0
        %970 = vmatprep.subr.bf16.mxu0 0
        %971 = vmatpush1.bf16.xpose.msra.mxu0 0
        %972 = vmatprep.subr.bf16.mxu0 0
        %973 = vmatpush1.bf16.xpose.msra.mxu0 0
        %974 = vmatprep.subr.bf16.mxu0 0
        %975 = vmatpush1.bf16.xpose.msra.mxu0 0
        %976 = vmatprep.subr.bf16.mxu0 0
        %977 = vmatpush1.bf16.xpose.msra.mxu0 0
        %978 = vmatprep.subr.bf16.mxu0 0
        %979 = vmatpush1.bf16.xpose.msra.mxu0 0
        %980 = vmatprep.mubr.bf16.mxu0 0
        %981 = vmatmul.mubr.bf16.gmra.mrb[0].mxu0 %v531
        %v982 = vpop.f32.mrb[0].mxu0
        %v983 = vadd.f32 0.0, %v982
        %v984 = vpop.f32.mrb[0].mxu0
        %v985 = vpop.f32.mrb[0].mxu0
        %v986 = vpop.f32.mrb[0].mxu0
        %987 = vdwg.mxu0
        %v988 = vsel %vm576, %v940, -inf
        %989 = vmax.xlane.f32.xlu0 %v988
        %v990 = vpop.xlane.xlu0 %989
        %v991 = vsel %vm576, %v983, -inf
        %992 = vmax.xlane.f32.xlu0 %v991
        %v993 = vpop.xlane.xlu0 %992
        %v994 = vsub.f32 %v940, %v990
        %v995 = vsub.f32 %v983, %v993
        %v996 = vmul.f32 %v994, 1.442695
        %v997 = vpow.pop %v996
        %v998 = vmul.f32 %v995, 1.442695
        %v999 = vpow.pop %v998
        %v1000 = vsel %vm576, %v997, 0.0
        %1001 = vadd.xlane.f32.xlu0 %v1000
        %v1002 = vpop.xlane.xlu0 %1001
        %v1003 = vsel %vm576, %v999, 0.0
        %1004 = vadd.xlane.f32.xlu0 %v1003
        %v1005 = vpop.xlane.xlu0 %1004
        %v1006 = vpack.c.bf16 %v997, %v997
        %v1007 = vpack.c.bf16 %v999, %v999
        %v1009 = vsel %vm576, %v1006, 0
        %v1011 = vsel %vm600, %v900, 0
        %1013 = vmatprep.subr.bf16.mxu0 0
        %1014 = vmatpush1.bf16.msra.mxu0 %v1011
        %1015 = vmatprep.subr.bf16.mxu0 0
        %1016 = vmatpush1.bf16.msra.mxu0 0
        %1017 = vmatprep.subr.bf16.mxu0 0
        %1018 = vmatpush1.bf16.msra.mxu0 0
        %1019 = vmatprep.subr.bf16.mxu0 0
        %1020 = vmatpush1.bf16.msra.mxu0 0
        %1021 = vmatprep.subr.bf16.mxu0 0
        %1022 = vmatpush1.bf16.msra.mxu0 0
        %1023 = vmatprep.subr.bf16.mxu0 0
        %1024 = vmatpush1.bf16.msra.mxu0 0
        %1025 = vmatprep.subr.bf16.mxu0 0
        %1026 = vmatpush1.bf16.msra.mxu0 0
        %1027 = vmatprep.subr.bf16.mxu0 0
        %1028 = vmatpush1.bf16.msra.mxu0 0
        %1029 = vmatprep.subr.bf16.mxu0 0
        %1030 = vmatpush1.bf16.msra.mxu0 0
        %1031 = vmatprep.subr.bf16.mxu0 0
        %1032 = vmatpush1.bf16.msra.mxu0 0
        %1033 = vmatprep.subr.bf16.mxu0 0
        %1034 = vmatpush1.bf16.msra.mxu0 0
        %1035 = vmatprep.subr.bf16.mxu0 0
        %1036 = vmatpush1.bf16.msra.mxu0 0
        %1037 = vmatprep.subr.bf16.mxu0 0
        %1038 = vmatpush1.bf16.msra.mxu0 0
        %1039 = vmatprep.subr.bf16.mxu0 0
        %1040 = vmatpush1.bf16.msra.mxu0 0
        %1041 = vmatprep.subr.bf16.mxu0 0
        %1042 = vmatpush1.bf16.msra.mxu0 0
        %1043 = vmatprep.subr.bf16.mxu0 0
        %1044 = vmatpush1.bf16.msra.mxu0 0
        %1045 = vmatprep.mubr.bf16.mxu0 0
        %1046 = vmatmul.mubr.bf16.gmra.mrb[0].mxu0 %v1009
        %v1047 = vpop.f32.mrb[0].mxu0
        %v1048 = vadd.f32 0.0, %v1047
        %v1049 = vpop.f32.mrb[0].mxu0
        %v1050 = vpop.f32.mrb[0].mxu0
        %v1051 = vpop.f32.mrb[0].mxu0
        %1052 = vdwg.mxu0
        %v1054 = vsel %vm576, %v1007, 0
        %v1056 = vsel %vm600, %v901, 0
        %1058 = vmatprep.subr.bf16.mxu0 0
        %1059 = vmatpush1.bf16.msra.mxu0 %v1056
        %1060 = vmatprep.subr.bf16.mxu0 0
        %1061 = vmatpush1.bf16.msra.mxu0 0
        %1062 = vmatprep.subr.bf16.mxu0 0
        %1063 = vmatpush1.bf16.msra.mxu0 0
        %1064 = vmatprep.subr.bf16.mxu0 0
        %1065 = vmatpush1.bf16.msra.mxu0 0
        %1066 = vmatprep.subr.bf16.mxu0 0
        %1067 = vmatpush1.bf16.msra.mxu0 0
        %1068 = vmatprep.subr.bf16.mxu0 0
        %1069 = vmatpush1.bf16.msra.mxu0 0
        %1070 = vmatprep.subr.bf16.mxu0 0
        %1071 = vmatpush1.bf16.msra.mxu0 0
        %1072 = vmatprep.subr.bf16.mxu0 0
        %1073 = vmatpush1.bf16.msra.mxu0 0
        %1074 = vmatprep.subr.bf16.mxu0 0
        %1075 = vmatpush1.bf16.msra.mxu0 0
        %1076 = vmatprep.subr.bf16.mxu0 0
        %1077 = vmatpush1.bf16.msra.mxu0 0
        %1078 = vmatprep.subr.bf16.mxu0 0
        %1079 = vmatpush1.bf16.msra.mxu0 0
        %1080 = vmatprep.subr.bf16.mxu0 0
        %1081 = vmatpush1.bf16.msra.mxu0 0
        %1082 = vmatprep.subr.bf16.mxu0 0
        %1083 = vmatpush1.bf16.msra.mxu0 0
        %1084 = vmatprep.subr.bf16.mxu0 0
        %1085 = vmatpush1.bf16.msra.mxu0 0
        %1086 = vmatprep.subr.bf16.mxu0 0
        %1087 = vmatpush1.bf16.msra.mxu0 0
        %1088 = vmatprep.subr.bf16.mxu0 0
        %1089 = vmatpush1.bf16.msra.mxu0 0
        %1090 = vmatprep.mubr.bf16.mxu0 0
        %1091 = vmatmul.mubr.bf16.gmra.mrb[0].mxu0 %v1054
        %v1092 = vpop.f32.mrb[0].mxu0
        %v1093 = vadd.f32 0.0, %v1092
        %v1094 = vpop.f32.mrb[0].mxu0
        %v1095 = vpop.f32.mrb[0].mxu0
        %v1096 = vpop.f32.mrb[0].mxu0
        %1097 = vdwg.mxu0
        %v1098 = vrcp.pop %v1002
        %v1099 = vrcp.pop %v1005
        %v1100 = vmul.f32 %v1048, %v1098
        %v1101 = vmul.f32 %v1093, %v1099
        %v1102 = vpack.c.bf16 %v691, %v690
        %v1103 = vpack.c.bf16 %v899, %v898
        %v1104 = vld [vmem:[%s4] sm:$0xf]
        %v1105 = vld [vmem:[%s4 + $0x4] sm:$0xf]
        %v1106 = vld [vmem:[%s4 + $0x8] sm:$0xf]
        %v1107 = vld [vmem:[%s4 + $0xc] sm:$0xf]
        %v1108 = vld [vmem:[%s5] sm:$0x1]
        %v1110 = vlaneseq
        %v1111 = vshrl.u32 %v1110, 7
        %v1112 = vsub.s32 0, %v1111
        %v1113 = vrot.slane %v1108, %v1112
        %v1119 = vunpack.c.l.b16 %v1104
        %v1120 = vunpack.c.l.b16 %v1105
        %v1121 = vunpack.c.l.b16 %v1106
        %v1122 = vunpack.c.l.b16 %v1107
        %v1123 = vpack.c.b16 %v1120, %v1119
        %v1124 = vpack.c.b16 %v1122, %v1121
        %v1128 = vsel %vm483, %v1102, 0
        %v1131 = vsel %vm483, %v1103, 0
        %1133 = vmatprep.subr.bf16.mxu0 0
        %1134 = vmatpush1.bf16.msra.mxu0 %v1123
        %1135 = vmatprep.subr.bf16.mxu0 0
        %1136 = vmatpush1.bf16.msra.mxu0 %v1124
        %1137 = vmatprep.subr.bf16.mxu0 0
        %1138 = vmatpush1.bf16.msra.mxu0 0
        %1139 = vmatprep.subr.bf16.mxu0 0
        %1140 = vmatpush1.bf16.msra.mxu0 0
        %1141 = vmatprep.subr.bf16.mxu0 0
        %1142 = vmatpush1.bf16.msra.mxu0 0
        %1143 = vmatprep.subr.bf16.mxu0 0
        %1144 = vmatpush1.bf16.msra.mxu0 0
        %1145 = vmatprep.subr.bf16.mxu0 0
        %1146 = vmatpush1.bf16.msra.mxu0 0
        %1147 = vmatprep.subr.bf16.mxu0 0
        %1148 = vmatpush1.bf16.msra.mxu0 0
        %1149 = vmatprep.subr.bf16.mxu0 0
        %1150 = vmatpush1.bf16.msra.mxu0 0
        %1151 = vmatprep.subr.bf16.mxu0 0
        %1152 = vmatpush1.bf16.msra.mxu0 0
        %1153 = vmatprep.subr.bf16.mxu0 0
        %1154 = vmatpush1.bf16.msra.mxu0 0
        %1155 = vmatprep.subr.bf16.mxu0 0
        %1156 = vmatpush1.bf16.msra.mxu0 0
        %1157 = vmatprep.subr.bf16.mxu0 0
        %1158 = vmatpush1.bf16.msra.mxu0 0
        %1159 = vmatprep.subr.bf16.mxu0 0
        %1160 = vmatpush1.bf16.msra.mxu0 0
        %1161 = vmatprep.subr.bf16.mxu0 0
        %1162 = vmatpush1.bf16.msra.mxu0 0
        %1163 = vmatprep.subr.bf16.mxu0 0
        %1164 = vmatpush1.bf16.msra.mxu0 0
        %1165 = vmatprep.mubr.bf16.mxu0 0
        %1166 = vmatmul.mubr.bf16.gmra.mrb[0].mxu0 %v1128
        %v1167 = vpop.f32.mrb[0].mxu0
        %v1168 = vadd.f32 %v1113, %v1167
        %v1169 = vpop.f32.mrb[0].mxu0
        %v1170 = vpop.f32.mrb[0].mxu0
        %v1171 = vadd.f32 %v1113, %v1170
        %v1172 = vpop.f32.mrb[0].mxu0
        %1173 = vmatprep.mubr.bf16.mxu0 0
        %1174 = vmatmul.mubr.bf16.gmra.mrb[0].mxu0 %v1131
        %v1175 = vpop.f32.mrb[0].mxu0
        %v1176 = vadd.f32 %v1113, %v1175
        %v1177 = vpop.f32.mrb[0].mxu0
        %v1178 = vpop.f32.mrb[0].mxu0
        %v1179 = vadd.f32 %v1113, %v1178
        %v1180 = vpop.f32.mrb[0].mxu0
        %1181 = vdwg.mxu0
        %v1182 = vmax.f32 %v1168, 0.0
        %v1183 = vmax.f32 %v1171, 0.0
        %v1184 = vmax.f32 %v1176, 0.0
        %v1185 = vmax.f32 %v1179, 0.0
        %v1186 = vld [vmem:[%s6] sm:$0x1]
        %v1187 = vld [vmem:[%s7] sm:$0x1]
        %v1188 = vsel %vm483, %v1182, 0.0
        %1189 = vadd.xlane.f32.xlu0 %v1188
        %v1190 = vpop.xlane.xlu0 %1189
        %v1191 = vsel %vm483, %v1183, 0.0
        %1192 = vadd.xlane.f32.xlu0 %v1191
        %v1193 = vpop.xlane.xlu0 %1192
        %v1194 = vsel %vm483, %v1184, 0.0
        %1195 = vadd.xlane.f32.xlu0 %v1194
        %v1196 = vpop.xlane.xlu0 %1195
        %v1197 = vsel %vm483, %v1185, 0.0
        %1198 = vadd.xlane.f32.xlu0 %v1197
        %v1199 = vpop.xlane.xlu0 %1198
        %v1200 = vrcp.pop 32.0
        %v1201 = vmul.f32 %v1190, %v1200
        %v1202 = vmul.f32 %v1193, %v1200
        %v1203 = vmul.f32 %v1196, %v1200
        %v1204 = vmul.f32 %v1199, %v1200
        %v1205 = vmul.f32 %v1182, %v1182
        %v1206 = vmul.f32 %v1183, %v1183
        %v1207 = vmul.f32 %v1184, %v1184
        %v1208 = vmul.f32 %v1185, %v1185
        %v1209 = vsel %vm483, %v1205, 0.0
        %1210 = vadd.xlane.f32.xlu0 %v1209
        %v1211 = vpop.xlane.xlu0 %1210
        %v1212 = vsel %vm483, %v1206, 0.0
        %1213 = vadd.xlane.f32.xlu0 %v1212
        %v1214 = vpop.xlane.xlu0 %1213
        %v1215 = vsel %vm483, %v1207, 0.0
        %1216 = vadd.xlane.f32.xlu0 %v1215
        %v1217 = vpop.xlane.xlu0 %1216
        %v1218 = vsel %vm483, %v1208, 0.0
        %1219 = vadd.xlane.f32.xlu0 %v1218
        %v1220 = vpop.xlane.xlu0 %1219
        %v1221 = vmul.f32 %v1211, %v1200
        %v1222 = vmul.f32 %v1214, %v1200
        %v1223 = vmul.f32 %v1217, %v1200
        %v1224 = vmul.f32 %v1220, %v1200
        %v1225 = vmul.f32 %v1201, %v1201
        %v1226 = vmul.f32 %v1202, %v1202
        %v1227 = vmul.f32 %v1203, %v1203
        %v1228 = vmul.f32 %v1204, %v1204
        %v1229 = vsub.f32 %v1221, %v1225
        %v1230 = vsub.f32 %v1222, %v1226
        %v1231 = vsub.f32 %v1223, %v1227
        %v1232 = vsub.f32 %v1224, %v1228
        %v1233 = vmax.f32 %v1229, 0.0
        %v1234 = vmax.f32 %v1230, 0.0
        %v1235 = vmax.f32 %v1231, 0.0
        %v1236 = vmax.f32 %v1232, 0.0
        %v1237 = vsub.f32 %v1182, %v1201
        %v1238 = vsub.f32 %v1183, %v1202
        %v1239 = vsub.f32 %v1184, %v1203
        %v1240 = vsub.f32 %v1185, %v1204
        %v1241 = vadd.f32 %v1233, 1e-05
        %v1242 = vadd.f32 %v1234, 1e-05
        %v1243 = vadd.f32 %v1235, 1e-05
        %v1244 = vadd.f32 %v1236, 1e-05
        %v1245 = vrsqrt.pop %v1241
        %v1246 = vrsqrt.pop %v1242
        %v1247 = vrsqrt.pop %v1243
        %v1248 = vrsqrt.pop %v1244
        %v1249 = vmul.f32 %v1237, %v1245
        %v1250 = vmul.f32 %v1238, %v1246
        %v1251 = vmul.f32 %v1239, %v1247
        %v1252 = vmul.f32 %v1240, %v1248
        %v1254 = vlaneseq
        %v1255 = vshrl.u32 %v1254, 7
        %v1256 = vsub.s32 0, %v1255
        %v1257 = vrot.slane %v1186, %v1256
        %v1259 = vmul.f32 %v1249, %v1257
        %v1260 = vmul.f32 %v1250, %v1257
        %v1261 = vmul.f32 %v1251, %v1257
        %v1262 = vmul.f32 %v1252, %v1257
        %v1264 = vlaneseq
        %v1265 = vshrl.u32 %v1264, 7
        %v1266 = vsub.s32 0, %v1265
        %v1267 = vrot.slane %v1187, %v1266
        %v1269 = vadd.f32 %v1259, %v1267
        %v1270 = vadd.f32 %v1260, %v1267
        %v1271 = vadd.f32 %v1261, %v1267
        %v1272 = vadd.f32 %v1262, %v1267
        %1275 = vrot.lane.b32.xlu0 %v1269, 32
        %v1276 = vpop.permute.xlu0 %1275
        %1277 = vrot.lane.b32.xlu0 %v1270, 32
        %v1278 = vpop.permute.xlu0 %1277
        %1283 = vrot.lane.b32.xlu0 %v1271, 64
        %v1284 = vpop.permute.xlu0 %1283
        %1285 = vrot.lane.b32.xlu0 %v1272, 64
        %v1286 = vpop.permute.xlu0 %1285
        %1291 = vrot.lane.b32.xlu0 %v1100, 96
        %v1292 = vpop.permute.xlu0 %1291
        %1293 = vrot.lane.b32.xlu0 %v1101, 96
        %v1294 = vpop.permute.xlu0 %1293
        %v1297 = vsel %vm483, %v456, %v1276
        %v1298 = vsel %vm483, %v457, %v1278
        %vm1299 = vcmask 523264
        %v1300 = vsel %vm1299, %v1297, %v1284
        %v1301 = vsel %vm1299, %v1298, %v1286
        %vm1302 = vcmask 785408
        %v1303 = vsel %vm1302, %v1300, %v1292
        %v1304 = vsel %vm1302, %v1301, %v1294
        %v1305 = vpack.c.bf16 %v1304, %v1303
        %v1306 = vld [vmem:[%s8] sm:$0xff]
        %v1307 = vld [vmem:[%s8 + $0x8] sm:$0xff]
        %v1308 = vld [vmem:[%s8 + $0x10] sm:$0xff]
        %v1309 = vld [vmem:[%s8 + $0x18] sm:$0xff]
        %v1310 = vld [vmem:[%s8 + $0x20] sm:$0xff]
        %v1311 = vld [vmem:[%s8 + $0x28] sm:$0xff]
        %v1312 = vld [vmem:[%s8 + $0x30] sm:$0xff]
        %v1313 = vld [vmem:[%s8 + $0x38] sm:$0xff]
        %v1314 = vld [vmem:[%s8 + $0x40] sm:$0xff]
        %v1315 = vld [vmem:[%s8 + $0x48] sm:$0xff]
        %v1316 = vld [vmem:[%s8 + $0x50] sm:$0xff]
        %v1317 = vld [vmem:[%s8 + $0x58] sm:$0xff]
        %v1318 = vld [vmem:[%s8 + $0x60] sm:$0xff]
        %v1319 = vld [vmem:[%s8 + $0x68] sm:$0xff]
        %v1320 = vld [vmem:[%s8 + $0x70] sm:$0xff]
        %v1321 = vld [vmem:[%s8 + $0x78] sm:$0xff]
        %v1322 = vld [vmem:[%s9] sm:$0x3]
        %v1324 = vlaneseq
        %v1325 = vshrl.u32 %v1324, 7
        %v1326 = vsub.s32 0, %v1325
        %v1327 = vrot.slane %v1322, %v1326
        %v1328 = vlaneseq
        %v1329 = vshrl.u32 %v1328, 7
        %v1330 = vsub.s32 1, %v1329
        %v1331 = vrot.slane %v1322, %v1330
        %v1350 = vunpack.c.l.b16 %v1306
        %v1351 = vunpack.c.h.b16 %v1306
        %v1352 = vunpack.c.l.b16 %v1307
        %v1353 = vunpack.c.h.b16 %v1307
        %v1354 = vunpack.c.l.b16 %v1308
        %v1355 = vunpack.c.h.b16 %v1308
        %v1356 = vunpack.c.l.b16 %v1309
        %v1357 = vunpack.c.h.b16 %v1309
        %v1358 = vunpack.c.l.b16 %v1310
        %v1359 = vunpack.c.h.b16 %v1310
        %v1360 = vunpack.c.l.b16 %v1311
        %v1361 = vunpack.c.h.b16 %v1311
        %v1362 = vunpack.c.l.b16 %v1312
        %v1363 = vunpack.c.h.b16 %v1312
        %v1364 = vunpack.c.l.b16 %v1313
        %v1365 = vunpack.c.h.b16 %v1313
        %v1366 = vunpack.c.l.b16 %v1314
        %v1367 = vunpack.c.h.b16 %v1314
        %v1368 = vunpack.c.l.b16 %v1315
        %v1369 = vunpack.c.h.b16 %v1315
        %v1370 = vunpack.c.l.b16 %v1316
        %v1371 = vunpack.c.h.b16 %v1316
        %v1372 = vunpack.c.l.b16 %v1317
        %v1373 = vunpack.c.h.b16 %v1317
        %v1374 = vunpack.c.l.b16 %v1318
        %v1375 = vunpack.c.h.b16 %v1318
        %v1376 = vunpack.c.l.b16 %v1319
        %v1377 = vunpack.c.h.b16 %v1319
        %v1378 = vunpack.c.l.b16 %v1320
        %v1379 = vunpack.c.h.b16 %v1320
        %v1380 = vunpack.c.l.b16 %v1321
        %v1381 = vunpack.c.h.b16 %v1321
        %v1382 = vpack.c.b16 %v1352, %v1350
        %v1383 = vpack.c.b16 %v1353, %v1351
        %v1384 = vpack.c.b16 %v1356, %v1354
        %v1385 = vpack.c.b16 %v1357, %v1355
        %v1386 = vpack.c.b16 %v1360, %v1358
        %v1387 = vpack.c.b16 %v1361, %v1359
        %v1388 = vpack.c.b16 %v1364, %v1362
        %v1389 = vpack.c.b16 %v1365, %v1363
        %v1390 = vpack.c.b16 %v1368, %v1366
        %v1391 = vpack.c.b16 %v1369, %v1367
        %v1392 = vpack.c.b16 %v1372, %v1370
        %v1393 = vpack.c.b16 %v1373, %v1371
        %v1394 = vpack.c.b16 %v1376, %v1374
        %v1395 = vpack.c.b16 %v1377, %v1375
        %v1396 = vpack.c.b16 %v1380, %v1378
        %v1397 = vpack.c.b16 %v1381, %v1379
        %1414 = vmatprep.subr.bf16.mxu0 %v1383
        %1415 = vmatpush1.bf16.msra.mxu0 %v1382
        %1416 = vmatprep.subr.bf16.mxu0 %v1385
        %1417 = vmatpush1.bf16.msra.mxu0 %v1384
        %1418 = vmatprep.subr.bf16.mxu0 %v1387
        %1419 = vmatpush1.bf16.msra.mxu0 %v1386
        %1420 = vmatprep.subr.bf16.mxu0 %v1389
        %1421 = vmatpush1.bf16.msra.mxu0 %v1388
        %1422 = vmatprep.subr.bf16.mxu0 %v1391
        %1423 = vmatpush1.bf16.msra.mxu0 %v1390
        %1424 = vmatprep.subr.bf16.mxu0 %v1393
        %1425 = vmatpush1.bf16.msra.mxu0 %v1392
        %1426 = vmatprep.subr.bf16.mxu0 %v1395
        %1427 = vmatpush1.bf16.msra.mxu0 %v1394
        %1428 = vmatprep.subr.bf16.mxu0 %v1397
        %1429 = vmatpush1.bf16.msra.mxu0 %v1396
        %1430 = vmatprep.subr.bf16.mxu0 0
        %1431 = vmatpush1.bf16.msra.mxu0 0
        %1432 = vmatprep.subr.bf16.mxu0 0
        %1433 = vmatpush1.bf16.msra.mxu0 0
        %1434 = vmatprep.subr.bf16.mxu0 0
        %1435 = vmatpush1.bf16.msra.mxu0 0
        %1436 = vmatprep.subr.bf16.mxu0 0
        %1437 = vmatpush1.bf16.msra.mxu0 0
        %1438 = vmatprep.subr.bf16.mxu0 0
        %1439 = vmatpush1.bf16.msra.mxu0 0
        %1440 = vmatprep.subr.bf16.mxu0 0
        %1441 = vmatpush1.bf16.msra.mxu0 0
        %1442 = vmatprep.subr.bf16.mxu0 0
        %1443 = vmatpush1.bf16.msra.mxu0 0
        %1444 = vmatprep.subr.bf16.mxu0 0
        %1445 = vmatpush1.bf16.msra.mxu0 0
        %1446 = vmatprep.mubr.bf16.mxu0 0
        %1447 = vmatmul.mubr.bf16.gmra.mrb[0].mxu0 %v1305
        %v1448 = vpop.f32.mrb[0].mxu0
        %v1449 = vadd.f32 %v1327, %v1448
        %v1450 = vpop.f32.mrb[0].mxu0
        %v1451 = vadd.f32 %v1331, %v1450
        %v1452 = vpop.f32.mrb[0].mxu0
        %v1453 = vadd.f32 %v1327, %v1452
        %v1454 = vpop.f32.mrb[0].mxu0
        %v1455 = vadd.f32 %v1331, %v1454
        %1456 = vdwg.mxu0
        %v1457 = vxor.u32 %v1449, 2147483648
        %v1458 = vxor.u32 %v1453, 2147483648
        %v1459 = vmul.f32 %v1457, 1.442695
        %v1460 = vpow.pop %v1459
        %v1461 = vmul.f32 %v1458, 1.442695
        %v1462 = vpow.pop %v1461
        %v1463 = vadd.f32 %v1460, 1.0
        %v1464 = vadd.f32 %v1462, 1.0
        %v1465 = vrcp.pop %v1463
        %v1466 = vmul.f32 1.0, %v1465
        %v1467 = vrcp.pop %v1464
        %v1468 = vmul.f32 1.0, %v1467
        %v1469 = vmax.f32 %v1451, 0.0
        %v1470 = vmax.f32 %v1455, 0.0
        %v1471 = vsub.f32 %v1469, %v1303
        %v1472 = vsub.f32 %v1470, %v1304
        %v1473 = vmul.f32 %v1466, %v1471
        %v1474 = vmul.f32 %v1468, %v1472
        %v1475 = vadd.f32 %v1473, %v1303
        %v1476 = vadd.f32 %v1474, %v1304
        %v1477 = vpack.c.bf16 %v1476, %v1475
        %v1478 = vld [vmem:[#allocation6] sm:$0xff]
        %v1479 = vld [vmem:[#allocation6 + $0x8] sm:$0xff]
        %v1480 = vld [vmem:[#allocation6 + $0x10] sm:$0xff]
        %v1481 = vld [vmem:[#allocation6 + $0x18] sm:$0xff]
        %v1482 = vld [vmem:[#allocation6 + $0x20] sm:$0xff]
        %v1483 = vld [vmem:[#allocation6 + $0x28] sm:$0xff]
        %v1484 = vld [vmem:[#allocation6 + $0x30] sm:$0xff]
        %v1485 = vld [vmem:[#allocation6 + $0x38] sm:$0xff]
        %v1486 = vld [vmem:[#allocation6 + $0x40] sm:$0xff]
        %v1487 = vld [vmem:[#allocation6 + $0x48] sm:$0xff]
        %v1488 = vld [vmem:[#allocation6 + $0x50] sm:$0xff]
        %v1489 = vld [vmem:[#allocation6 + $0x58] sm:$0xff]
        %v1490 = vld [vmem:[#allocation6 + $0x60] sm:$0xff]
        %v1491 = vld [vmem:[#allocation6 + $0x68] sm:$0xff]
        %v1492 = vld [vmem:[#allocation6 + $0x70] sm:$0xff]
        %v1493 = vld [vmem:[#allocation6 + $0x78] sm:$0xff]
        %v1494 = vld [vmem:[%s11] sm:$0x3]
        %v1496 = vlaneseq
        %v1497 = vshrl.u32 %v1496, 7
        %v1498 = vsub.s32 0, %v1497
        %v1499 = vrot.slane %v1494, %v1498
        %v1500 = vlaneseq
        %v1501 = vshrl.u32 %v1500, 7
        %v1502 = vsub.s32 1, %v1501
        %v1503 = vrot.slane %v1494, %v1502
        %v1522 = vunpack.c.l.b16 %v1478
        %v1523 = vunpack.c.h.b16 %v1478
        %v1524 = vunpack.c.l.b16 %v1479
        %v1525 = vunpack.c.h.b16 %v1479
        %v1526 = vunpack.c.l.b16 %v1480
        %v1527 = vunpack.c.h.b16 %v1480
        %v1528 = vunpack.c.l.b16 %v1481
        %v1529 = vunpack.c.h.b16 %v1481
        %v1530 = vunpack.c.l.b16 %v1482
        %v1531 = vunpack.c.h.b16 %v1482
        %v1532 = vunpack.c.l.b16 %v1483
        %v1533 = vunpack.c.h.b16 %v1483
        %v1534 = vunpack.c.l.b16 %v1484
        %v1535 = vunpack.c.h.b16 %v1484
        %v1536 = vunpack.c.l.b16 %v1485
        %v1537 = vunpack.c.h.b16 %v1485
        %v1538 = vunpack.c.l.b16 %v1486
        %v1539 = vunpack.c.h.b16 %v1486
        %v1540 = vunpack.c.l.b16 %v1487
        %v1541 = vunpack.c.h.b16 %v1487
        %v1542 = vunpack.c.l.b16 %v1488
        %v1543 = vunpack.c.h.b16 %v1488
        %v1544 = vunpack.c.l.b16 %v1489
        %v1545 = vunpack.c.h.b16 %v1489
        %v1546 = vunpack.c.l.b16 %v1490
        %v1547 = vunpack.c.h.b16 %v1490
        %v1548 = vunpack.c.l.b16 %v1491
        %v1549 = vunpack.c.h.b16 %v1491
        %v1550 = vunpack.c.l.b16 %v1492
        %v1551 = vunpack.c.h.b16 %v1492
        %v1552 = vunpack.c.l.b16 %v1493
        %v1553 = vunpack.c.h.b16 %v1493
        %v1554 = vpack.c.b16 %v1524, %v1522
        %v1555 = vpack.c.b16 %v1525, %v1523
        %v1556 = vpack.c.b16 %v1528, %v1526
        %v1557 = vpack.c.b16 %v1529, %v1527
        %v1558 = vpack.c.b16 %v1532, %v1530
        %v1559 = vpack.c.b16 %v1533, %v1531
        %v1560 = vpack.c.b16 %v1536, %v1534
        %v1561 = vpack.c.b16 %v1537, %v1535
        %v1562 = vpack.c.b16 %v1540, %v1538
        %v1563 = vpack.c.b16 %v1541, %v1539
        %v1564 = vpack.c.b16 %v1544, %v1542
        %v1565 = vpack.c.b16 %v1545, %v1543
        %v1566 = vpack.c.b16 %v1548, %v1546
        %v1567 = vpack.c.b16 %v1549, %v1547
        %v1568 = vpack.c.b16 %v1552, %v1550
        %v1569 = vpack.c.b16 %v1553, %v1551
        %1586 = vmatprep.subr.bf16.mxu0 %v1555
        %1587 = vmatpush1.bf16.msra.mxu0 %v1554
        %1588 = vmatprep.subr.bf16.mxu0 %v1557
        %1589 = vmatpush1.bf16.msra.mxu0 %v1556
        %1590 = vmatprep.subr.bf16.mxu0 %v1559
        %1591 = vmatpush1.bf16.msra.mxu0 %v1558
        %1592 = vmatprep.subr.bf16.mxu0 %v1561
        %1593 = vmatpush1.bf16.msra.mxu0 %v1560
        %1594 = vmatprep.subr.bf16.mxu0 %v1563
        %1595 = vmatpush1.bf16.msra.mxu0 %v1562
        %1596 = vmatprep.subr.bf16.mxu0 %v1565
        %1597 = vmatpush1.bf16.msra.mxu0 %v1564
        %1598 = vmatprep.subr.bf16.mxu0 %v1567
        %1599 = vmatpush1.bf16.msra.mxu0 %v1566
        %1600 = vmatprep.subr.bf16.mxu0 %v1569
        %1601 = vmatpush1.bf16.msra.mxu0 %v1568
        %1602 = vmatprep.subr.bf16.mxu0 0
        %1603 = vmatpush1.bf16.msra.mxu0 0
        %1604 = vmatprep.subr.bf16.mxu0 0
        %1605 = vmatpush1.bf16.msra.mxu0 0
        %1606 = vmatprep.subr.bf16.mxu0 0
        %1607 = vmatpush1.bf16.msra.mxu0 0
        %1608 = vmatprep.subr.bf16.mxu0 0
        %1609 = vmatpush1.bf16.msra.mxu0 0
        %1610 = vmatprep.subr.bf16.mxu0 0
        %1611 = vmatpush1.bf16.msra.mxu0 0
        %1612 = vmatprep.subr.bf16.mxu0 0
        %1613 = vmatpush1.bf16.msra.mxu0 0
        %1614 = vmatprep.subr.bf16.mxu0 0
        %1615 = vmatpush1.bf16.msra.mxu0 0
        %1616 = vmatprep.subr.bf16.mxu0 0
        %1617 = vmatpush1.bf16.msra.mxu0 0
        %1618 = vmatprep.mubr.bf16.mxu0 0
        %1619 = vmatmul.mubr.bf16.gmra.mrb[0].mxu0 %v1477
        %v1620 = vpop.f32.mrb[0].mxu0
        %v1621 = vadd.f32 %v1499, %v1620
        %v1622 = vpop.f32.mrb[0].mxu0
        %v1623 = vadd.f32 %v1503, %v1622
        %v1624 = vpop.f32.mrb[0].mxu0
        %v1625 = vadd.f32 %v1499, %v1624
        %v1626 = vpop.f32.mrb[0].mxu0
        %v1627 = vadd.f32 %v1503, %v1626
        %1628 = vdwg.mxu0
        %v1629 = vxor.u32 %v1621, 2147483648
        %v1630 = vxor.u32 %v1625, 2147483648
        %v1631 = vmul.f32 %v1629, 1.442695
        %v1632 = vpow.pop %v1631
        %v1633 = vmul.f32 %v1630, 1.442695
        %v1634 = vpow.pop %v1633
        %v1635 = vadd.f32 %v1632, 1.0
        %v1636 = vadd.f32 %v1634, 1.0
        %v1637 = vrcp.pop %v1635
        %v1638 = vmul.f32 1.0, %v1637
        %v1639 = vrcp.pop %v1636
        %v1640 = vmul.f32 1.0, %v1639
        %v1641 = vmax.f32 %v1623, 0.0
        %v1642 = vmax.f32 %v1627, 0.0
        %v1643 = vsub.f32 %v1641, %v1475
        %v1644 = vsub.f32 %v1642, %v1476
        %v1645 = vmul.f32 %v1638, %v1643
        %v1646 = vmul.f32 %v1640, %v1644
        %v1647 = vadd.f32 %v1645, %v1475
        %v1648 = vadd.f32 %v1646, %v1476
        %v1649 = vpack.c.bf16 %v1648, %v1647
        %v1650 = vld [vmem:[%s12] sm:$0xf]
        %v1651 = vld [vmem:[%s12 + $0x4] sm:$0xf]
        %v1652 = vld [vmem:[%s12 + $0x8] sm:$0xf]
        %v1653 = vld [vmem:[%s12 + $0xc] sm:$0xf]
        %v1654 = vld [vmem:[%s12 + $0x10] sm:$0xf]
        %v1655 = vld [vmem:[%s12 + $0x14] sm:$0xf]
        %v1656 = vld [vmem:[%s12 + $0x18] sm:$0xf]
        %v1657 = vld [vmem:[%s12 + $0x1c] sm:$0xf]
        %v1658 = vld [vmem:[%s12 + $0x20] sm:$0xf]
        %v1659 = vld [vmem:[%s12 + $0x24] sm:$0xf]
        %v1660 = vld [vmem:[%s12 + $0x28] sm:$0xf]
        %v1661 = vld [vmem:[%s12 + $0x2c] sm:$0xf]
        %v1662 = vld [vmem:[%s12 + $0x30] sm:$0xf]
        %v1663 = vld [vmem:[%s12 + $0x34] sm:$0xf]
        %v1664 = vld [vmem:[%s12 + $0x38] sm:$0xf]
        %v1665 = vld [vmem:[%s12 + $0x3c] sm:$0xf]
        %v1666 = vld [vmem:[%s13] sm:$0x1]
        %v1668 = vlaneseq
        %v1669 = vshrl.u32 %v1668, 7
        %v1670 = vsub.s32 0, %v1669
        %v1671 = vrot.slane %v1666, %v1670
        %v1689 = vunpack.c.l.b16 %v1650
        %v1690 = vunpack.c.l.b16 %v1651
        %v1691 = vunpack.c.l.b16 %v1652
        %v1692 = vunpack.c.l.b16 %v1653
        %v1693 = vunpack.c.l.b16 %v1654
        %v1694 = vunpack.c.l.b16 %v1655
        %v1695 = vunpack.c.l.b16 %v1656
        %v1696 = vunpack.c.l.b16 %v1657
        %v1697 = vunpack.c.l.b16 %v1658
        %v1698 = vunpack.c.l.b16 %v1659
        %v1699 = vunpack.c.l.b16 %v1660
        %v1700 = vunpack.c.l.b16 %v1661
        %v1701 = vunpack.c.l.b16 %v1662
        %v1702 = vunpack.c.l.b16 %v1663
        %v1703 = vunpack.c.l.b16 %v1664
        %v1704 = vunpack.c.l.b16 %v1665
        %v1705 = vpack.c.b16 %v1690, %v1689
        %v1706 = vpack.c.b16 %v1692, %v1691
        %v1707 = vpack.c.b16 %v1694, %v1693
        %v1708 = vpack.c.b16 %v1696, %v1695
        %v1709 = vpack.c.b16 %v1698, %v1697
        %v1710 = vpack.c.b16 %v1700, %v1699
        %v1711 = vpack.c.b16 %v1702, %v1701
        %v1712 = vpack.c.b16 %v1704, %v1703
        %1721 = vmatprep.subr.bf16.mxu0 0
        %1722 = vmatpush1.bf16.msra.mxu0 %v1705
        %1723 = vmatprep.subr.bf16.mxu0 0
        %1724 = vmatpush1.bf16.msra.mxu0 %v1706
        %1725 = vmatprep.subr.bf16.mxu0 0
        %1726 = vmatpush1.bf16.msra.mxu0 %v1707
        %1727 = vmatprep.subr.bf16.mxu0 0
        %1728 = vmatpush1.bf16.msra.mxu0 %v1708
        %1729 = vmatprep.subr.bf16.mxu0 0
        %1730 = vmatpush1.bf16.msra.mxu0 %v1709
        %1731 = vmatprep.subr.bf16.mxu0 0
        %1732 = vmatpush1.bf16.msra.mxu0 %v1710
        %1733 = vmatprep.subr.bf16.mxu0 0
        %1734 = vmatpush1.bf16.msra.mxu0 %v1711
        %1735 = vmatprep.subr.bf16.mxu0 0
        %1736 = vmatpush1.bf16.msra.mxu0 %v1712
        %1737 = vmatprep.subr.bf16.mxu0 0
        %1738 = vmatpush1.bf16.msra.mxu0 0
        %1739 = vmatprep.subr.bf16.mxu0 0
        %1740 = vmatpush1.bf16.msra.mxu0 0
        %1741 = vmatprep.subr.bf16.mxu0 0
        %1742 = vmatpush1.bf16.msra.mxu0 0
        %1743 = vmatprep.subr.bf16.mxu0 0
        %1744 = vmatpush1.bf16.msra.mxu0 0
        %1745 = vmatprep.subr.bf16.mxu0 0
        %1746 = vmatpush1.bf16.msra.mxu0 0
        %1747 = vmatprep.subr.bf16.mxu0 0
        %1748 = vmatpush1.bf16.msra.mxu0 0
        %1749 = vmatprep.subr.bf16.mxu0 0
        %1750 = vmatpush1.bf16.msra.mxu0 0
        %1751 = vmatprep.subr.bf16.mxu0 0
        %1752 = vmatpush1.bf16.msra.mxu0 0
        %1753 = vmatprep.mubr.bf16.mxu0 0
        %1754 = vmatmul.mubr.bf16.gmra.mrb[0].mxu0 %v1649
        %v1755 = vpop.f32.mrb[0].mxu0
        %v1756 = vadd.f32 %v1671, %v1755
        %v1757 = vpop.f32.mrb[0].mxu0
        %v1758 = vpop.f32.mrb[0].mxu0
        %v1759 = vadd.f32 %v1671, %v1758
        %v1760 = vpop.f32.mrb[0].mxu0
        %1761 = vdwg.mxu0
        %v1762 = vmax.f32 %v1756, 0.0
        %v1763 = vmax.f32 %v1759, 0.0
        %v1764 = vld [vmem:[%s14] sm:$0x1]
        %v1765 = vld [vmem:[%s15] sm:$0x1]
        %v1766 = vsel %vm483, %v1762, 0.0
        %1767 = vadd.xlane.f32.xlu0 %v1766
        %v1768 = vpop.xlane.xlu0 %1767
        %v1769 = vsel %vm483, %v1763, 0.0
        %1770 = vadd.xlane.f32.xlu0 %v1769
        %v1771 = vpop.xlane.xlu0 %1770
        %v1772 = vmul.f32 %v1768, %v1200
        %v1773 = vmul.f32 %v1771, %v1200
        %v1774 = vmul.f32 %v1762, %v1762
        %v1775 = vmul.f32 %v1763, %v1763
        %v1776 = vsel %vm483, %v1774, 0.0
        %1777 = vadd.xlane.f32.xlu0 %v1776
        %v1778 = vpop.xlane.xlu0 %1777
        %v1779 = vsel %vm483, %v1775, 0.0
        %1780 = vadd.xlane.f32.xlu0 %v1779
        %v1781 = vpop.xlane.xlu0 %1780
        %v1782 = vmul.f32 %v1778, %v1200
        %v1783 = vmul.f32 %v1781, %v1200
        %v1784 = vmul.f32 %v1772, %v1772
        %v1785 = vmul.f32 %v1773, %v1773
        %v1786 = vsub.f32 %v1782, %v1784
        %v1787 = vsub.f32 %v1783, %v1785
        %v1788 = vmax.f32 %v1786, 0.0
        %v1789 = vmax.f32 %v1787, 0.0
        %v1790 = vsub.f32 %v1762, %v1772
        %v1791 = vsub.f32 %v1763, %v1773
        %v1792 = vadd.f32 %v1788, 1e-05
        %v1793 = vadd.f32 %v1789, 1e-05
        %v1794 = vrsqrt.pop %v1792
        %v1795 = vrsqrt.pop %v1793
        %v1796 = vmul.f32 %v1790, %v1794
        %v1797 = vmul.f32 %v1791, %v1795
        %v1799 = vlaneseq
        %v1800 = vshrl.u32 %v1799, 7
        %v1801 = vsub.s32 0, %v1800
        %v1802 = vrot.slane %v1764, %v1801
        %v1804 = vmul.f32 %v1796, %v1802
        %v1805 = vmul.f32 %v1797, %v1802
        %v1807 = vlaneseq
        %v1808 = vshrl.u32 %v1807, 7
        %v1809 = vsub.s32 0, %v1808
        %v1810 = vrot.slane %v1765, %v1809
        %v1812 = vadd.f32 %v1804, %v1810
        %v1813 = vadd.f32 %v1805, %v1810
        %1814 = vst.msk [vmem:[%s452] sm:$0xff] %vm483, %v1812
        %1815 = vst.msk [vmem:[%s452 + $0x8] sm:$0xff] %vm483, %v1813
        %p1816 = scmp.lt.s32.totalorder %s42, 2
        %s1817 = scalar_select %p1816, %s42, 2
        %s1818 = smul.addr %s1817, 2
        %s1819 = smul.addr %s1818, 8
        %s1820 = scalar_lea.vmem %s16, %s1819
        // Predicated region
        $region77: #{triple_attention_highway.1} parent=71 // pred_check
          %p1821 = pneg %p333
        $region78: #{triple_attention_highway.1} parent=71 // pred_check_branch
          %1823 = sbr.rel (%p1821) target = $region80
        $region79: #{triple_attention_highway.1} parent=71 // pred_region
          _
        $region80: #{triple_attention_highway.1} parent=71 // pred_fallthru
          _
      $region72: #{triple_attention_highway.1} parent=5 // pred_fallthru
        _
      %p1824 = scmp.le.s32.totalorder 2, %s37
      // Predicated region
      $region81: #{triple_attention_highway.1} parent=5 // pred_check
        %p1825 = pneg %p1824
      $region82: #{triple_attention_highway.1} parent=5 // pred_check_branch
        %1827 = sbr.rel (%p1825) target = $region84
      $region83: #{triple_attention_highway.1} parent=5 // pred_region
        %s1828 = ssub.s32 %s37, 2
        // Predicated region
        $region85: #{triple_attention_highway.1} parent=83 // pred_check
          %p1829 = pneg %p339
        $region86: #{triple_attention_highway.1} parent=83 // pred_check_branch
          %1831 = sbr.rel (%p1829) target = $region88
        $region87: #{triple_attention_highway.1} parent=83 // pred_region
          %p1832 = scmp.lt.s32.totalorder %s43, 2
          %s1833 = scalar_select %p1832, %s43, 2
          %s1834 = smul.addr %s1833, 2
          %s1835 = smul.addr %s1834, 8
          %s1836 = scalar_lea.vmem %s16, %s1835
        $region88: #{triple_attention_highway.1} parent=83 // pred_fallthru
          _
      $region84: #{triple_attention_highway.1} parent=5 // pred_fallthru
        _
    $region6: #{triple_attention_highway.1} parent=1 // loop_footer
      %s41 = sadd.s32 1, %s37
    $region7: #{triple_attention_highway.1} parent=1 // loop_footer_branch
      %36 = sbr.rel target = $region3
    $region8: #{triple_attention_highway.1} parent=1 // loop_exit
      _
    %1837 = vsyncpa [#allocation7], 1
    %s1838 = scalar_lea.sflag [#allocation7], 1
    %1839 = vsyncpa %s1838, 1

</llo_original>
